<compile_context>
chip_gen: v7x
topology: tpu7x:2x2x1
jax: 0.10.0
libtpu: 0.0.40
codegen_flags: <defaults>
</compile_context>

<pallas_src>
import functools

import jax
import jax.numpy as jnp
from jax.experimental import pallas as pl
from jax.experimental.pallas import tpu as pltpu


# ----------------------------------------------------------------------------
# Kernel 1: text head (runs once, tiny)
#   t_enh  = txt @ W_fc^T              (Adapter.fc re-applied to text, see note)
#   t_mix  = ratio_text * t_enh + (1 - ratio_text) * txt
#   txt_n  = t_mix * rsqrt(sum(t_mix^2, -1))
#   txt_s  = exp(logit_scale) * txt_n  (pre-scaled copy that feeds the logits
#                                       matmul; the wrapper transposes it once
#                                       to (F, N) so the hot kernel does a
#                                       plain (M,K)@(K,N) dot)
# ----------------------------------------------------------------------------
def text_head_kernel(ratio_text, scale_ref, txt_ref, wfct_ref,
                     txtf_ref, txts_ref):
    txt = txt_ref[...]                                        # (N, F) f32
    # w_fc was pre-transposed to (in, out) in the wrapper -> plain dot.
    t_enh = jnp.dot(txt.astype(jnp.bfloat16), wfct_ref[...],
                    preferred_element_type=jnp.float32)
    t_mix = ratio_text * t_enh + (1.0 - ratio_text) * txt
    # NOTE: no epsilon, matching the PyTorch reference (x / x.norm()).
    inv = jax.lax.rsqrt(jnp.sum(t_mix * t_mix, axis=-1, keepdims=True))
    txt_n = t_mix * inv
    txtf_ref[...] = txt_n                                     # module output
    scale = jnp.exp(scale_ref[0, 0])                          # folded here once
    txts_ref[...] = scale * txt_n                             # feeds logits


# ----------------------------------------------------------------------------
# Kernel 2: fused image encoder stub + CustomCLIP head
#   grid = (B/block_b  [parallel],  K/block_k  [arbitrary, reduction])
#   acc   (=|+=) x_slab.bf16 @ w_enc_slab          (MXU, bf16 in / f32 acc)
#   at last k:
#     x_ad    = acc.bf16 @ W_fc_t                  (Adapter.fc, plain dot)
#     img_mix = ratio * x_ad + (1-ratio) * acc
#     img_n   = img_mix * rsqrt(||img_mix||^2)
#     logits  = img_n @ txt_scaled_t               (f32 x f32, scale pre-folded)
# TODO(synk): full CLIP visual backbone (ResNet-50 / ViT) replaced by a single
#             linear projection stub; no clean single-kernel equivalent.
# ----------------------------------------------------------------------------
def fused_image_kernel(ratio, x_ref, wenc_ref, txt_t_ref, wfct_ref,
                       logits_ref, imgf_ref, acc_ref):
    k = pl.program_id(1)

    # One K-slab of the encoder projection on the MXU (cast to bf16 in-kernel).
    prod = jnp.dot(x_ref[...].astype(jnp.bfloat16), wenc_ref[...],
                   preferred_element_type=jnp.float32)

    @pl.when(k == 0)
    def _():
        acc_ref[...] = prod            # direct write: no zero + read-modify-write

    @pl.when(k > 0)
    def _():
        acc_ref[...] += prod

    @pl.when(k == pl.num_programs(1) - 1)
    def _():
        img = acc_ref[...]                                    # (tb, F) f32
        x_ad = jnp.dot(img.astype(jnp.bfloat16), wfct_ref[...],
                       preferred_element_type=jnp.float32)    # Adapter.fc
        img_mix = ratio * x_ad + (1.0 - ratio) * img
        inv = jax.lax.rsqrt(jnp.sum(img_mix * img_mix, axis=-1, keepdims=True))
        img_n = img_mix * inv
        # Tiny logits matmul kept f32 x f32 for accuracy; exp(logit_scale) is
        # already folded into txt_t_ref, so the MXU result is stored directly.
        logits_ref[...] = jnp.dot(img_n, txt_t_ref[...],
                                  preferred_element_type=jnp.float32)
        imgf_ref[...] = img_n


# ----------------------------------------------------------------------------
# Tile-size pickers (VMEM-budget aware)
# ----------------------------------------------------------------------------
def _pick_block_b(B, cap=256, min_tiles=1):
    """Largest multiple-of-8 divisor of B that is <= cap (else B itself).

    min_tiles > 1 (e.g. 2 on v7x) caps block_b so the 'parallel' batch axis
    has at least that many tiles and both TensorCores get work.
    """
    if min_tiles > 1:
        cap = min(cap, max(8, B // min_tiles))
    best = None
    d = 8
    while d <= min(B, cap):
        if B % d == 0:
            best = d
        d += 8
    return best if best is not None else B


def _pick_block_k(K, F, N, block_b, budget_bytes):
    """Largest divisor of K (multiple of 128, or K itself) fitting the budget."""
    def working_set(bk):
        img = block_b * bk * 4 * 2            # f32 image slab, double-buffered
        wenc = bk * F * 2 * 2                 # bf16 w_enc slab, double-buffered
        resident = (F * N * 4 + F * F * 2) * 2  # txt_t f32 + w_fc_t bf16
        outs = (block_b * N * 4 + block_b * F * 4) * 2
        acc = block_b * F * 4
        return img + wenc + resident + outs + acc

    if working_set(K) <= budget_bytes:
        return K                               # whole reduction in one slab
    best = None
    d = 128
    while d <= K:
        if K % d == 0 and working_set(d) <= budget_bytes:
            best = d
        d += 128
    if best is not None:
        return best
    d = 128                                    # nothing fits: smallest legal slab
    while d <= K:
        if K % d == 0:
            return d
        d += 128
    return K


# ----------------------------------------------------------------------------
# Python wrapper
# ----------------------------------------------------------------------------
def custom_clip_forward(image, w_enc, text_features, w_fc, logit_scale,
                        ratio=0.2, ratio_text=0.2, *, block_b=None, block_k=None,
                        vmem_limit_bytes=48 * 1024 * 1024, min_b_tiles=1):
    """Returns [logits, image_features, text_features] like CustomCLIP.forward."""
    # TODO(synk): CLIP text encoder (tokenization + text transformer over the
    #             class prompts) replaced by the fixed `text_features` table.
    B = image.shape[0]
    x_flat = image.reshape(B, -1)                 # NCHW flatten, native f32 dtype
    K = x_flat.shape[1]
    F = w_enc.shape[1]
    N = text_features.shape[0]

    # One-time weight prep (at real scale: hoist outside jit and keep the bf16
    # copies persistent so the casts are not re-paid per call — they are no-ops
    # here because __main__ already passes bf16 weights).
    w_enc_bf = jnp.asarray(w_enc, jnp.bfloat16)             # (K, F)
    w_fc_t_bf = jnp.asarray(w_fc, jnp.bfloat16).T           # (in, out) layout
    txt_f32 = jnp.asarray(text_features, jnp.float32)
    scale = jnp.asarray(logit_scale, jnp.float32).reshape(1, 1)

    if block_b is None or B % block_b:
        block_b = _pick_block_b(B, cap=256, min_tiles=min_b_tiles)
    budget = int(0.75 * vmem_limit_bytes)                    # headroom for compiler
    if block_k is None or K % block_k:
        block_k = _pick_block_k(K, F, N, block_b, budget)
    nb, nk = B // block_b, K // block_k

    # ---- text head (runs once) ----
    txt_f, txt_scaled = pl.pallas_call(
        functools.partial(text_head_kernel, float(ratio_text)),
        out_shape=(jax.ShapeDtypeStruct((N, F), jnp.float32),
                   jax.ShapeDtypeStruct((N, F), jnp.float32)),
        grid_spec=pltpu.PrefetchScalarGridSpec(
            num_scalar_prefetch=0, grid=(1,),
            in_specs=[
                pl.BlockSpec(memory_space=pltpu.MemorySpace.SMEM),   # logit_scale
                pl.BlockSpec((N, F), lambda i: (0, 0)),              # text features
                pl.BlockSpec((F, F), lambda i: (0, 0)),              # adapter W^T
            ],
            out_specs=(pl.BlockSpec((N, F), lambda i: (0, 0)),
                       pl.BlockSpec((N, F), lambda i: (0, 0)))),
    )(scale, txt_f32, w_fc_t_bf)

    # One-time tiny layout plumbing (256 KiB): present the scaled text matrix as
    # (F, N) so the fused kernel's logits matmul is a plain (M,K)@(K,N) dot with
    # no per-b-tile in-kernel transpose.
    txt_scaled_t = txt_scaled.T

    # ---- fused image encoder stub + head ----
    logits, img_f = pl.pallas_call(
        functools.partial(fused_image_kernel, float(ratio)),
        out_shape=(jax.ShapeDtypeStruct((B, N), jnp.float32),
                   jax.ShapeDtypeStruct((B, F), jnp.float32)),
        grid_spec=pltpu.PrefetchScalarGridSpec(
            num_scalar_prefetch=0,
            grid=(nb, nk),
            in_specs=[
                pl.BlockSpec((block_b, block_k), lambda b, k: (b, k)),  # image (f32)
                pl.BlockSpec((block_k, F), lambda b, k: (k, 0)),        # encoder W slab
                pl.BlockSpec((F, N), lambda b, k: (0, 0)),              # scaled text^T (resident)
                pl.BlockSpec((F, F), lambda b, k: (0, 0)),              # adapter W^T (resident)
            ],
            out_specs=(
                pl.BlockSpec((block_b, N), lambda b, k: (b, 0)),        # logits
                pl.BlockSpec((block_b, F), lambda b, k: (b, 0)),        # image features
            ),
            scratch_shapes=[pltpu.VMEM((block_b, F), jnp.float32)],     # encoder acc
        ),
        compiler_params=pltpu.CompilerParams(
            dimension_semantics=("parallel", "arbitrary"),
            vmem_limit_bytes=vmem_limit_bytes),
    )(x_flat, w_enc_bf, txt_scaled_t, w_fc_t_bf)

    return [logits, img_f, txt_f]


# ----------------------------------------------------------------------------
# Pure-JAX f32 reference (silent correctness check; uses the same bf16-rounded
# weights so the comparison isolates the kernel's own arithmetic path)
# ----------------------------------------------------------------------------
def _reference(image, w_enc_eff, text_features, w_fc_eff, logit_scale,
               ratio, ratio_text):
    B = image.shape[0]
    img = image.reshape(B, -1).astype(jnp.float32) @ w_enc_eff
    txt = text_features.astype(jnp.float32)
    x = img @ w_fc_eff.T
    img_mix = ratio * x + (1 - ratio) * img
    t_enh = txt @ w_fc_eff.T
    txt_mix = ratio_text * t_enh + (1 - ratio_text) * txt
    img_n = img_mix / jnp.linalg.norm(img_mix, axis=-1, keepdims=True)
    txt_n = txt_mix / jnp.linalg.norm(txt_mix, axis=-1, keepdims=True)
    logits = jnp.exp(logit_scale) * img_n @ txt_n.T
    return logits, img_n, txt_n


if __name__ == "__main__":
    key = jax.random.PRNGKey(0)
    # Lane-dense small shapes consistent with the module:
    #   image NCHW, n_feat = 512 (ViT-B backbone), 128 classnames, batch 8.
    B, C, H, W = 8, 4, 16, 16
    N_CLASSES, N_FEAT = 128, 512
    RATIO, RATIO_TEXT = 0.2, 0.2       # cfg.TRAINER.VLAD.ratio / ratio_text

    k1, k2, k3, k4 = jax.random.split(key, 4)
    image = jax.random.normal(k1, (B, C, H, W), jnp.float32)
    w_enc = jax.random.normal(k2, (C * H * W, N_FEAT), jnp.float32) * 0.02
    text_features = jax.random.normal(k3, (N_CLASSES, N_FEAT), jnp.float32)
    # Adapter.fc weight, PyTorch layout (out_features, in_features), no bias.
    # (Adapter.fc_t exists when TEXT_ENHANCED=True but its output is discarded
    #  by the original forward, so it does not affect any result.)
    w_fc = jax.random.normal(k4, (N_FEAT, N_FEAT), jnp.float32) / (N_FEAT ** 0.5)
    # CLIP default logit_scale = ln(1/0.07).
    logit_scale = jnp.asarray(jnp.log(1.0 / 0.07), jnp.float32)

    # Persistent bf16 weight copies (cast paid once, not per forward call).
    w_enc_bf = w_enc.astype(jnp.bfloat16)
    w_fc_bf = w_fc.astype(jnp.bfloat16)

    logits, img_f, txt_f = custom_clip_forward(
        image, w_enc_bf, text_features, w_fc_bf, logit_scale,
        ratio=RATIO, ratio_text=RATIO_TEXT)
    jax.block_until_ready((logits, img_f, txt_f))

    ref_logits, ref_img, ref_txt = _reference(
        image, w_enc_bf.astype(jnp.float32), text_features,
        w_fc_bf.astype(jnp.float32), logit_scale, RATIO, RATIO_TEXT)
    # Remaining error is the in-kernel bf16 activation casts (weights identical).
    assert logits.shape == (B, N_CLASSES)
    assert jnp.allclose(logits, ref_logits, atol=5e-2, rtol=2e-2)
    assert jnp.allclose(img_f, ref_img, atol=2e-2, rtol=1e-2)
    assert jnp.allclose(txt_f, ref_txt, atol=2e-2, rtol=1e-2)

    print("KERNEL_OK")
</pallas_src>

<mosaic_0001>
module attributes {stable_mosaic.version = 11 : i64} {
  func.func @text_head_kernel(%arg0: i32, %arg1: memref<1x1xf32, #tpu.memory_space<smem>>, %arg2: memref<128x512xf32, #tpu.memory_space<vmem>>, %arg3: memref<512x512xbf16, #tpu.memory_space<vmem>>, %arg4: memref<128x512xf32, #tpu.memory_space<vmem>>, %arg5: memref<128x512xf32, #tpu.memory_space<vmem>>) attributes {dimension_semantics = [#tpu.dimension_semantics<arbitrary>], iteration_bounds = array<i64: 1>, scalar_prefetch = 0 : i64, scratch_operands = 0 : i64, tpu.core_type = #tpu.core_type<tc>, window_params = [{transform_indices = @transform_0, window_bounds = array<i64: 1, 1>}, {pipeline_mode = #tpu.pipeline_mode<synchronous>, transform_indices = @transform_1, window_bounds = array<i64: 128, 512>}, {pipeline_mode = #tpu.pipeline_mode<synchronous>, transform_indices = @transform_2, window_bounds = array<i64: 512, 512>}, {pipeline_mode = #tpu.pipeline_mode<synchronous>, transform_indices = @transform_3, window_bounds = array<i64: 128, 512>}, {pipeline_mode = #tpu.pipeline_mode<synchronous>, transform_indices = @transform_4, window_bounds = array<i64: 128, 512>}]} {
    %c0 = arith.constant 0 : index
    %c0_0 = arith.constant 0 : index
    %0 = vector.load %arg2[%c0, %c0_0] : memref<128x512xf32, #tpu.memory_space<vmem>>, vector<128x512xf32>
    %1 = arith.truncf %0 : vector<128x512xf32> to vector<128x512xbf16>
    %c0_1 = arith.constant 0 : index
    %c0_2 = arith.constant 0 : index
    %2 = vector.load %arg3[%c0_1, %c0_2] : memref<512x512xbf16, #tpu.memory_space<vmem>>, vector<512x512xbf16>
    %cst = arith.constant dense<0.000000e+00> : vector<128x512xf32>
    %3 = tpu.matmul %1, %2, %cst {dimension_numbers = #tpu.dot_dimension_numbers<[1], [0], [0], [1], [0, 0, 1, 1], [], []>} : vector<128x512xbf16>, vector<512x512xbf16>, vector<128x512xf32> -> vector<128x512xf32>
    %cst_3 = arith.constant 2.000000e-01 : f32
    %4 = vector.broadcast %cst_3 : f32 to vector<128x512xf32>
    %5 = arith.mulf %4, %3 : vector<128x512xf32>
    %cst_4 = arith.constant 8.000000e-01 : f32
    %6 = vector.broadcast %cst_4 : f32 to vector<128x512xf32>
    %7 = arith.mulf %6, %0 : vector<128x512xf32>
    %8 = arith.addf %5, %7 : vector<128x512xf32>
    %9 = arith.mulf %8, %8 : vector<128x512xf32>
    %cst_5 = arith.constant dense<0.000000e+00> : vector<128xf32>
    %10 = vector.multi_reduction <add>, %9, %cst_5 [1] : vector<128x512xf32> to vector<128xf32>
    %11 = vector.shape_cast %10 : vector<128xf32> to vector<128x1xf32>
    %12 = math.rsqrt %11 : vector<128x1xf32>
    %13 = vector.broadcast %12 : vector<128x1xf32> to vector<128x512xf32>
    %14 = arith.mulf %8, %13 : vector<128x512xf32>
    %c0_6 = arith.constant 0 : index
    %c0_7 = arith.constant 0 : index
    %15 = vector.load %arg4[%c0_6, %c0_7] : memref<128x512xf32, #tpu.memory_space<vmem>>, vector<128x512xf32>
    tpu.vector_store %arg4[%c0_6, %c0_7], %14 {strides = array<i32>} : memref<128x512xf32, #tpu.memory_space<vmem>>, vector<128x512xf32>,
    %c0_8 = arith.constant 0 : index
    %c0_9 = arith.constant 0 : index
    %16 = memref.load %arg1[%c0_8, %c0_9] : memref<1x1xf32, #tpu.memory_space<smem>>
    %17 = math.exp %16 : f32
    %18 = vector.broadcast %17 : f32 to vector<128x512xf32>
    %19 = arith.mulf %18, %14 : vector<128x512xf32>
    %c0_10 = arith.constant 0 : index
    %c0_11 = arith.constant 0 : index
    %20 = vector.load %arg5[%c0_10, %c0_11] : memref<128x512xf32, #tpu.memory_space<vmem>>, vector<128x512xf32>
    tpu.vector_store %arg5[%c0_10, %c0_11], %19 {strides = array<i32>} : memref<128x512xf32, #tpu.memory_space<vmem>>, vector<128x512xf32>,
    return
  }
  func.func @transform_0(%arg0: i32) -> (i32, i32) {
    %c0_i32 = arith.constant 0 : i32
    %c0_i32_0 = arith.constant 0 : i32
    %c0_i32_1 = arith.constant 0 : i32
    return %c0_i32, %c0_i32_0 : i32, i32
  }
  func.func @transform_1(%arg0: i32) -> (i32, i32) {
    %c0_i32 = arith.constant 0 : i32
    %c0_i32_0 = arith.constant 0 : i32
    %c0_i32_1 = arith.constant 0 : i32
    return %c0_i32, %c0_i32_0 : i32, i32
  }
  func.func @transform_2(%arg0: i32) -> (i32, i32) {
    %c0_i32 = arith.constant 0 : i32
    %c0_i32_0 = arith.constant 0 : i32
    %c0_i32_1 = arith.constant 0 : i32
    return %c0_i32, %c0_i32_0 : i32, i32
  }
  func.func @transform_3(%arg0: i32) -> (i32, i32) {
    %c0_i32 = arith.constant 0 : i32
    %c0_i32_0 = arith.constant 0 : i32
    %c0_i32_1 = arith.constant 0 : i32
    return %c0_i32, %c0_i32_0 : i32, i32
  }
  func.func @transform_4(%arg0: i32) -> (i32, i32) {
    %c0_i32 = arith.constant 0 : i32
    %c0_i32_0 = arith.constant 0 : i32
    %c0_i32_1 = arith.constant 0 : i32
    return %c0_i32, %c0_i32_0 : i32, i32
  }
}

</mosaic_0001>

<llo_original>
// kernel: tpu_custom_call.1
$region0: #{tpu_custom_call.1}
  #allocation0 [shape = 'u32[]', space=smem, size = 0x4, offset = 0x4, fixed_abs, tag = 'smem constant byte address 0x4 - core index']
  #allocation1 [shape = 'u32[144,128]{1,0:T(1,128)}', space=vmem, size = 0x12000, scoped, tag = 'internal scratch']
  #allocation2 [shape = 'f32[1,1]{1,0:T(1,128)S(6)}', space=smem, size = 0x200, scoped, tag = 'scoped memory for tpu_custom_call.1']
  %s0 = inlined_call_operand.<no memory space> [shape: f32[1,1], index: 0, kind: input, shape index: {}]
  %s1 = inlined_call_operand.hbm [shape: f32[128,512], index: 1, kind: input, shape index: {}]
  %s2 = inlined_call_operand.hbm [shape: bf16[512,512], index: 2, kind: input, shape index: {}]
  %s3 = inlined_call_operand.hbm [shape: f32[128,512], index: 3, kind: output, shape index: {0}]
  %s4 = inlined_call_operand.hbm [shape: f32[128,512], index: 4, kind: output, shape index: {1}]
  %5 = xla_tuple %s3, %s4
  %s6 = sld [smem:[#allocation0]]
  $region38: #{tpu_custom_call.1} parent=0
    _
  %s8 = ssub.s32 1, %s6
  %s9 = scalar_select 0, %s8, %s6
  %10 = sst [smem:[#allocation2]] %s0
  $region1: #{tpu_custom_call.1} parent=0
    #allocation3 [shape = 'u8[262144]{0}', space=vmem, size = 0x40000, scoped, tag = 'input window, operand 1, single buffered']
    #allocation4 [shape = 's32[1]{0}', space=sflag, size = 0x4, scoped, tag = 'scoped memory for tpu_custom_call.1']
    #allocation5 [shape = 's32[1]{0}', space=sflag, size = 0x4, scoped, tag = 'scoped memory for tpu_custom_call.1']
    #allocation6 [shape = 'u8[524288]{0}', space=vmem, size = 0x80000, scoped, tag = 'input window, operand 2, single buffered']
    #allocation7 [shape = 's32[1]{0}', space=sflag, size = 0x4, scoped, tag = 'scoped memory for tpu_custom_call.1']
    #allocation8 [shape = 'u8[262144]{0}', space=vmem, size = 0x40000, scoped, tag = 'output window, operand 0, single buffered']
    #allocation9 [shape = 'u8[262144]{0}', space=vmem, size = 0x40000, scoped, tag = 'output window, operand 1, single buffered']
    #allocation10 [shape = 's32[1]{0}', space=sflag, size = 0x4, scoped, tag = 'scoped memory for tpu_custom_call.1']
    %11 = vsyncpa [#allocation4], 0
    %12 = vsyncpa [#allocation7], 0
    %13 = vsyncpa [#allocation5], 0
    %14 = vsyncpa [#allocation10], 0
    // Predicated region
    $region2: #{tpu_custom_call.1} parent=1 // pred_check
      _
    $region3: #{tpu_custom_call.1} parent=1 // pred_check_branch
      %16 = sbr.rel (0) target = $region5
    $region4: #{tpu_custom_call.1} parent=1 // pred_region
      _
    $region5: #{tpu_custom_call.1} parent=1 // pred_fallthru
      _
    // Predicated region
    $region6: #{tpu_custom_call.1} parent=1 // pred_check
      _
    $region7: #{tpu_custom_call.1} parent=1 // pred_check_branch
      %18 = sbr.rel (0) target = $region9
    $region8: #{tpu_custom_call.1} parent=1 // pred_region
      %s20 = ssub.s32 8192, 8192
      %21 = vsyncadd [#allocation4], %s20
      %s22 = sshll.u32 [#allocation3], 4
      %s23 = int_to_ptr.vmem [resolvable:$true] %s22
      %28 = dma.hbm_to_vmem [thread:$0]  %s1, 8192, %s23, [#allocation4], 512, 512, 32
    $region9: #{tpu_custom_call.1} parent=1 // pred_fallthru
      _
    // Predicated region
    $region10: #{tpu_custom_call.1} parent=1 // pred_check
      _
    $region11: #{tpu_custom_call.1} parent=1 // pred_check_branch
      %30 = sbr.rel (0) target = $region13
    $region12: #{tpu_custom_call.1} parent=1 // pred_region
      %s32 = ssub.s32 16384, 16384
      %33 = vsyncadd [#allocation7], %s32
      %s34 = sshll.u32 [#allocation6], 4
      %s35 = int_to_ptr.vmem [resolvable:$true] %s34
      %40 = dma.hbm_to_vmem [thread:$0]  %s2, 16384, %s35, [#allocation7], 256, 256, 16
    $region13: #{tpu_custom_call.1} parent=1 // pred_fallthru
      _
    // Predicated region
    $region14: #{tpu_custom_call.1} parent=1 // pred_check
      _
    $region15: #{tpu_custom_call.1} parent=1 // pred_check_branch
      %42 = sbr.rel (0) target = $region17
    $region16: #{tpu_custom_call.1} parent=1 // pred_region
      %43 = dma.done [#allocation4], 8192
    $region17: #{tpu_custom_call.1} parent=1 // pred_fallthru
      _
    // Predicated region
    $region18: #{tpu_custom_call.1} parent=1 // pred_check
      _
    $region19: #{tpu_custom_call.1} parent=1 // pred_check_branch
      %45 = sbr.rel (0) target = $region21
    $region20: #{tpu_custom_call.1} parent=1 // pred_region
      %46 = dma.done [#allocation7], 16384
    $region21: #{tpu_custom_call.1} parent=1 // pred_fallthru
      _
    %v47 = vld [vmem:[#allocation3] sm:$0xff]
    %v48 = vld [vmem:[#allocation3 + $0x8] sm:$0xff]
    %v49 = vld [vmem:[#allocation3 + $0x10] sm:$0xff]
    %v50 = vld [vmem:[#allocation3 + $0x18] sm:$0xff]
    %v51 = vld [vmem:[#allocation3 + $0x20] sm:$0xff]
    %v52 = vld [vmem:[#allocation3 + $0x28] sm:$0xff]
    %v53 = vld [vmem:[#allocation3 + $0x30] sm:$0xff]
    %v54 = vld [vmem:[#allocation3 + $0x38] sm:$0xff]
    %v55 = vld [vmem:[#allocation3 + $0x40] sm:$0xff]
    %v56 = vld [vmem:[#allocation3 + $0x48] sm:$0xff]
    %v57 = vld [vmem:[#allocation3 + $0x50] sm:$0xff]
    %v58 = vld [vmem:[#allocation3 + $0x58] sm:$0xff]
    %v59 = vld [vmem:[#allocation3 + $0x60] sm:$0xff]
    %v60 = vld [vmem:[#allocation3 + $0x68] sm:$0xff]
    %v61 = vld [vmem:[#allocation3 + $0x70] sm:$0xff]
    %v62 = vld [vmem:[#allocation3 + $0x78] sm:$0xff]
    %v63 = vld [vmem:[#allocation3 + $0x80] sm:$0xff]
    %v64 = vld [vmem:[#allocation3 + $0x88] sm:$0xff]
    %v65 = vld [vmem:[#allocation3 + $0x90] sm:$0xff]
    %v66 = vld [vmem:[#allocation3 + $0x98] sm:$0xff]
    %v67 = vld [vmem:[#allocation3 + $0xa0] sm:$0xff]
    %v68 = vld [vmem:[#allocation3 + $0xa8] sm:$0xff]
    %v69 = vld [vmem:[#allocation3 + $0xb0] sm:$0xff]
    %v70 = vld [vmem:[#allocation3 + $0xb8] sm:$0xff]
    %v71 = vld [vmem:[#allocation3 + $0xc0] sm:$0xff]
    %v72 = vld [vmem:[#allocation3 + $0xc8] sm:$0xff]
    %v73 = vld [vmem:[#allocation3 + $0xd0] sm:$0xff]
    %v74 = vld [vmem:[#allocation3 + $0xd8] sm:$0xff]
    %v75 = vld [vmem:[#allocation3 + $0xe0] sm:$0xff]
    %v76 = vld [vmem:[#allocation3 + $0xe8] sm:$0xff]
    %v77 = vld [vmem:[#allocation3 + $0xf0] sm:$0xff]
    %v78 = vld [vmem:[#allocation3 + $0xf8] sm:$0xff]
    %v79 = vld [vmem:[#allocation3 + $0x100] sm:$0xff]
    %v80 = vld [vmem:[#allocation3 + $0x108] sm:$0xff]
    %v81 = vld [vmem:[#allocation3 + $0x110] sm:$0xff]
    %v82 = vld [vmem:[#allocation3 + $0x118] sm:$0xff]
    %v83 = vld [vmem:[#allocation3 + $0x120] sm:$0xff]
    %v84 = vld [vmem:[#allocation3 + $0x128] sm:$0xff]
    %v85 = vld [vmem:[#allocation3 + $0x130] sm:$0xff]
    %v86 = vld [vmem:[#allocation3 + $0x138] sm:$0xff]
    %v87 = vld [vmem:[#allocation3 + $0x140] sm:$0xff]
    %v88 = vld [vmem:[#allocation3 + $0x148] sm:$0xff]
    %v89 = vld [vmem:[#allocation3 + $0x150] sm:$0xff]
    %v90 = vld [vmem:[#allocation3 + $0x158] sm:$0xff]
    %v91 = vld [vmem:[#allocation3 + $0x160] sm:$0xff]
    %v92 = vld [vmem:[#allocation3 + $0x168] sm:$0xff]
    %v93 = vld [vmem:[#allocation3 + $0x170] sm:$0xff]
    %v94 = vld [vmem:[#allocation3 + $0x178] sm:$0xff]
    %v95 = vld [vmem:[#allocation3 + $0x180] sm:$0xff]
    %v96 = vld [vmem:[#allocation3 + $0x188] sm:$0xff]
    %v97 = vld [vmem:[#allocation3 + $0x190] sm:$0xff]
    %v98 = vld [vmem:[#allocation3 + $0x198] sm:$0xff]
    %v99 = vld [vmem:[#allocation3 + $0x1a0] sm:$0xff]
    %v100 = vld [vmem:[#allocation3 + $0x1a8] sm:$0xff]
    %v101 = vld [vmem:[#allocation3 + $0x1b0] sm:$0xff]
    %v102 = vld [vmem:[#allocation3 + $0x1b8] sm:$0xff]
    %v103 = vld [vmem:[#allocation3 + $0x1c0] sm:$0xff]
    %v104 = vld [vmem:[#allocation3 + $0x1c8] sm:$0xff]
    %v105 = vld [vmem:[#allocation3 + $0x1d0] sm:$0xff]
    %v106 = vld [vmem:[#allocation3 + $0x1d8] sm:$0xff]
    %v107 = vld [vmem:[#allocation3 + $0x1e0] sm:$0xff]
    %v108 = vld [vmem:[#allocation3 + $0x1e8] sm:$0xff]
    %v109 = vld [vmem:[#allocation3 + $0x1f0] sm:$0xff]
    %v110 = vld [vmem:[#allocation3 + $0x1f8] sm:$0xff]
    %v111 = vpack.c.bf16 %v51, %v47
    %v112 = vpack.c.bf16 %v52, %v48
    %v113 = vpack.c.bf16 %v53, %v49
    %v114 = vpack.c.bf16 %v54, %v50
    %v115 = vpack.c.bf16 %v59, %v55
    %v116 = vpack.c.bf16 %v60, %v56
    %v117 = vpack.c.bf16 %v61, %v57
    %v118 = vpack.c.bf16 %v62, %v58
    %v119 = vpack.c.bf16 %v67, %v63
    %v120 = vpack.c.bf16 %v68, %v64
    %v121 = vpack.c.bf16 %v69, %v65
    %v122 = vpack.c.bf16 %v70, %v66
    %v123 = vpack.c.bf16 %v75, %v71
    %v124 = vpack.c.bf16 %v76, %v72
    %v125 = vpack.c.bf16 %v77, %v73
    %v126 = vpack.c.bf16 %v78, %v74
    %v127 = vpack.c.bf16 %v83, %v79
    %v128 = vpack.c.bf16 %v84, %v80
    %v129 = vpack.c.bf16 %v85, %v81
    %v130 = vpack.c.bf16 %v86, %v82
    %v131 = vpack.c.bf16 %v91, %v87
    %v132 = vpack.c.bf16 %v92, %v88
    %v133 = vpack.c.bf16 %v93, %v89
    %v134 = vpack.c.bf16 %v94, %v90
    %v135 = vpack.c.bf16 %v99, %v95
    %v136 = vpack.c.bf16 %v100, %v96
    %v137 = vpack.c.bf16 %v101, %v97
    %v138 = vpack.c.bf16 %v102, %v98
    %v139 = vpack.c.bf16 %v107, %v103
    %v140 = vpack.c.bf16 %v108, %v104
    %v141 = vpack.c.bf16 %v109, %v105
    %v142 = vpack.c.bf16 %v110, %v106
    %v143 = vld [vmem:[#allocation6] sm:$0xff]
    %v144 = vld [vmem:[#allocation6 + $0x8] sm:$0xff]
    %v145 = vld [vmem:[#allocation6 + $0x10] sm:$0xff]
    %v146 = vld [vmem:[#allocation6 + $0x18] sm:$0xff]
    %v147 = vld [vmem:[#allocation6 + $0x20] sm:$0xff]
    %v148 = vld [vmem:[#allocation6 + $0x28] sm:$0xff]
    %v149 = vld [vmem:[#allocation6 + $0x30] sm:$0xff]
    %v150 = vld [vmem:[#allocation6 + $0x38] sm:$0xff]
    %v151 = vld [vmem:[#allocation6 + $0x40] sm:$0xff]
    %v152 = vld [vmem:[#allocation6 + $0x48] sm:$0xff]
    %v153 = vld [vmem:[#allocation6 + $0x50] sm:$0xff]
    %v154 = vld [vmem:[#allocation6 + $0x58] sm:$0xff]
    %v155 = vld [vmem:[#allocation6 + $0x60] sm:$0xff]
    %v156 = vld [vmem:[#allocation6 + $0x68] sm:$0xff]
    %v157 = vld [vmem:[#allocation6 + $0x70] sm:$0xff]
    %v158 = vld [vmem:[#allocation6 + $0x78] sm:$0xff]
    %v159 = vld [vmem:[#allocation6 + $0x80] sm:$0xff]
    %v160 = vld [vmem:[#allocation6 + $0x88] sm:$0xff]
    %v161 = vld [vmem:[#allocation6 + $0x90] sm:$0xff]
    %v162 = vld [vmem:[#allocation6 + $0x98] sm:$0xff]
    %v163 = vld [vmem:[#allocation6 + $0xa0] sm:$0xff]
    %v164 = vld [vmem:[#allocation6 + $0xa8] sm:$0xff]
    %v165 = vld [vmem:[#allocation6 + $0xb0] sm:$0xff]
    %v166 = vld [vmem:[#allocation6 + $0xb8] sm:$0xff]
    %v167 = vld [vmem:[#allocation6 + $0xc0] sm:$0xff]
    %v168 = vld [vmem:[#allocation6 + $0xc8] sm:$0xff]
    %v169 = vld [vmem:[#allocation6 + $0xd0] sm:$0xff]
    %v170 = vld [vmem:[#allocation6 + $0xd8] sm:$0xff]
    %v171 = vld [vmem:[#allocation6 + $0xe0] sm:$0xff]
    %v172 = vld [vmem:[#allocation6 + $0xe8] sm:$0xff]
    %v173 = vld [vmem:[#allocation6 + $0xf0] sm:$0xff]
    %v174 = vld [vmem:[#allocation6 + $0xf8] sm:$0xff]
    %v175 = vld [vmem:[#allocation6 + $0x100] sm:$0xff]
    %v176 = vld [vmem:[#allocation6 + $0x108] sm:$0xff]
    %v177 = vld [vmem:[#allocation6 + $0x110] sm:$0xff]
    %v178 = vld [vmem:[#allocation6 + $0x118] sm:$0xff]
    %v179 = vld [vmem:[#allocation6 + $0x120] sm:$0xff]
    %v180 = vld [vmem:[#allocation6 + $0x128] sm:$0xff]
    %v181 = vld [vmem:[#allocation6 + $0x130] sm:$0xff]
    %v182 = vld [vmem:[#allocation6 + $0x138] sm:$0xff]
    %v183 = vld [vmem:[#allocation6 + $0x140] sm:$0xff]
    %v184 = vld [vmem:[#allocation6 + $0x148] sm:$0xff]
    %v185 = vld [vmem:[#allocation6 + $0x150] sm:$0xff]
    %v186 = vld [vmem:[#allocation6 + $0x158] sm:$0xff]
    %v187 = vld [vmem:[#allocation6 + $0x160] sm:$0xff]
    %v188 = vld [vmem:[#allocation6 + $0x168] sm:$0xff]
    %v189 = vld [vmem:[#allocation6 + $0x170] sm:$0xff]
    %v190 = vld [vmem:[#allocation6 + $0x178] sm:$0xff]
    %v191 = vld [vmem:[#allocation6 + $0x180] sm:$0xff]
    %v192 = vld [vmem:[#allocation6 + $0x188] sm:$0xff]
    %v193 = vld [vmem:[#allocation6 + $0x190] sm:$0xff]
    %v194 = vld [vmem:[#allocation6 + $0x198] sm:$0xff]
    %v195 = vld [vmem:[#allocation6 + $0x1a0] sm:$0xff]
    %v196 = vld [vmem:[#allocation6 + $0x1a8] sm:$0xff]
    %v197 = vld [vmem:[#allocation6 + $0x1b0] sm:$0xff]
    %v198 = vld [vmem:[#allocation6 + $0x1b8] sm:$0xff]
    %v199 = vld [vmem:[#allocation6 + $0x1c0] sm:$0xff]
    %v200 = vld [vmem:[#allocation6 + $0x1c8] sm:$0xff]
    %v201 = vld [vmem:[#allocation6 + $0x1d0] sm:$0xff]
    %v202 = vld [vmem:[#allocation6 + $0x1d8] sm:$0xff]
    %v203 = vld [vmem:[#allocation6 + $0x1e0] sm:$0xff]
    %v204 = vld [vmem:[#allocation6 + $0x1e8] sm:$0xff]
    %v205 = vld [vmem:[#allocation6 + $0x1f0] sm:$0xff]
    %v206 = vld [vmem:[#allocation6 + $0x1f8] sm:$0xff]
    %v207 = vld [vmem:[#allocation6 + $0x200] sm:$0xff]
    %v208 = vld [vmem:[#allocation6 + $0x208] sm:$0xff]
    %v209 = vld [vmem:[#allocation6 + $0x210] sm:$0xff]
    %v210 = vld [vmem:[#allocation6 + $0x218] sm:$0xff]
    %v211 = vld [vmem:[#allocation6 + $0x220] sm:$0xff]
    %v212 = vld [vmem:[#allocation6 + $0x228] sm:$0xff]
    %v213 = vld [vmem:[#allocation6 + $0x230] sm:$0xff]
    %v214 = vld [vmem:[#allocation6 + $0x238] sm:$0xff]
    %v215 = vld [vmem:[#allocation6 + $0x240] sm:$0xff]
    %v216 = vld [vmem:[#allocation6 + $0x248] sm:$0xff]
    %v217 = vld [vmem:[#allocation6 + $0x250] sm:$0xff]
    %v218 = vld [vmem:[#allocation6 + $0x258] sm:$0xff]
    %v219 = vld [vmem:[#allocation6 + $0x260] sm:$0xff]
    %v220 = vld [vmem:[#allocation6 + $0x268] sm:$0xff]
    %v221 = vld [vmem:[#allocation6 + $0x270] sm:$0xff]
    %v222 = vld [vmem:[#allocation6 + $0x278] sm:$0xff]
    %v223 = vld [vmem:[#allocation6 + $0x280] sm:$0xff]
    %v224 = vld [vmem:[#allocation6 + $0x288] sm:$0xff]
    %v225 = vld [vmem:[#allocation6 + $0x290] sm:$0xff]
    %v226 = vld [vmem:[#allocation6 + $0x298] sm:$0xff]
    %v227 = vld [vmem:[#allocation6 + $0x2a0] sm:$0xff]
    %v228 = vld [vmem:[#allocation6 + $0x2a8] sm:$0xff]
    %v229 = vld [vmem:[#allocation6 + $0x2b0] sm:$0xff]
    %v230 = vld [vmem:[#allocation6 + $0x2b8] sm:$0xff]
    %v231 = vld [vmem:[#allocation6 + $0x2c0] sm:$0xff]
    %v232 = vld [vmem:[#allocation6 + $0x2c8] sm:$0xff]
    %v233 = vld [vmem:[#allocation6 + $0x2d0] sm:$0xff]
    %v234 = vld [vmem:[#allocation6 + $0x2d8] sm:$0xff]
    %v235 = vld [vmem:[#allocation6 + $0x2e0] sm:$0xff]
    %v236 = vld [vmem:[#allocation6 + $0x2e8] sm:$0xff]
    %v237 = vld [vmem:[#allocation6 + $0x2f0] sm:$0xff]
    %v238 = vld [vmem:[#allocation6 + $0x2f8] sm:$0xff]
    %v239 = vld [vmem:[#allocation6 + $0x300] sm:$0xff]
    %v240 = vld [vmem:[#allocation6 + $0x308] sm:$0xff]
    %v241 = vld [vmem:[#allocation6 + $0x310] sm:$0xff]
    %v242 = vld [vmem:[#allocation6 + $0x318] sm:$0xff]
    %v243 = vld [vmem:[#allocation6 + $0x320] sm:$0xff]
    %v244 = vld [vmem:[#allocation6 + $0x328] sm:$0xff]
    %v245 = vld [vmem:[#allocation6 + $0x330] sm:$0xff]
    %v246 = vld [vmem:[#allocation6 + $0x338] sm:$0xff]
    %v247 = vld [vmem:[#allocation6 + $0x340] sm:$0xff]
    %v248 = vld [vmem:[#allocation6 + $0x348] sm:$0xff]
    %v249 = vld [vmem:[#allocation6 + $0x350] sm:$0xff]
    %v250 = vld [vmem:[#allocation6 + $0x358] sm:$0xff]
    %v251 = vld [vmem:[#allocation6 + $0x360] sm:$0xff]
    %v252 = vld [vmem:[#allocation6 + $0x368] sm:$0xff]
    %v253 = vld [vmem:[#allocation6 + $0x370] sm:$0xff]
    %v254 = vld [vmem:[#allocation6 + $0x378] sm:$0xff]
    %v255 = vld [vmem:[#allocation6 + $0x380] sm:$0xff]
    %v256 = vld [vmem:[#allocation6 + $0x388] sm:$0xff]
    %v257 = vld [vmem:[#allocation6 + $0x390] sm:$0xff]
    %v258 = vld [vmem:[#allocation6 + $0x398] sm:$0xff]
    %v259 = vld [vmem:[#allocation6 + $0x3a0] sm:$0xff]
    %v260 = vld [vmem:[#allocation6 + $0x3a8] sm:$0xff]
    %v261 = vld [vmem:[#allocation6 + $0x3b0] sm:$0xff]
    %v262 = vld [vmem:[#allocation6 + $0x3b8] sm:$0xff]
    %v263 = vld [vmem:[#allocation6 + $0x3c0] sm:$0xff]
    %v264 = vld [vmem:[#allocation6 + $0x3c8] sm:$0xff]
    %v265 = vld [vmem:[#allocation6 + $0x3d0] sm:$0xff]
    %v266 = vld [vmem:[#allocation6 + $0x3d8] sm:$0xff]
    %v267 = vld [vmem:[#allocation6 + $0x3e0] sm:$0xff]
    %v268 = vld [vmem:[#allocation6 + $0x3e8] sm:$0xff]
    %v269 = vld [vmem:[#allocation6 + $0x3f0] sm:$0xff]
    %v270 = vld [vmem:[#allocation6 + $0x3f8] sm:$0xff]
    %v399 = vunpack.c.l.b16 %v143
    %v400 = vunpack.c.h.b16 %v143
    %v401 = vunpack.c.l.b16 %v144
    %v402 = vunpack.c.h.b16 %v144
    %v403 = vunpack.c.l.b16 %v145
    %v404 = vunpack.c.h.b16 %v145
    %v405 = vunpack.c.l.b16 %v146
    %v406 = vunpack.c.h.b16 %v146
    %v407 = vunpack.c.l.b16 %v147
    %v408 = vunpack.c.h.b16 %v147
    %v409 = vunpack.c.l.b16 %v148
    %v410 = vunpack.c.h.b16 %v148
    %v411 = vunpack.c.l.b16 %v149
    %v412 = vunpack.c.h.b16 %v149
    %v413 = vunpack.c.l.b16 %v150
    %v414 = vunpack.c.h.b16 %v150
    %v415 = vunpack.c.l.b16 %v151
    %v416 = vunpack.c.h.b16 %v151
    %v417 = vunpack.c.l.b16 %v152
    %v418 = vunpack.c.h.b16 %v152
    %v419 = vunpack.c.l.b16 %v153
    %v420 = vunpack.c.h.b16 %v153
    %v421 = vunpack.c.l.b16 %v154
    %v422 = vunpack.c.h.b16 %v154
    %v423 = vunpack.c.l.b16 %v155
    %v424 = vunpack.c.h.b16 %v155
    %v425 = vunpack.c.l.b16 %v156
    %v426 = vunpack.c.h.b16 %v156
    %v427 = vunpack.c.l.b16 %v157
    %v428 = vunpack.c.h.b16 %v157
    %v429 = vunpack.c.l.b16 %v158
    %v430 = vunpack.c.h.b16 %v158
    %v431 = vunpack.c.l.b16 %v159
    %v432 = vunpack.c.h.b16 %v159
    %v433 = vunpack.c.l.b16 %v160
    %v434 = vunpack.c.h.b16 %v160
    %v435 = vunpack.c.l.b16 %v161
    %v436 = vunpack.c.h.b16 %v161
    %v437 = vunpack.c.l.b16 %v162
    %v438 = vunpack.c.h.b16 %v162
    %v439 = vunpack.c.l.b16 %v163
    %v440 = vunpack.c.h.b16 %v163
    %v441 = vunpack.c.l.b16 %v164
    %v442 = vunpack.c.h.b16 %v164
    %v443 = vunpack.c.l.b16 %v165
    %v444 = vunpack.c.h.b16 %v165
    %v445 = vunpack.c.l.b16 %v166
    %v446 = vunpack.c.h.b16 %v166
    %v447 = vunpack.c.l.b16 %v167
    %v448 = vunpack.c.h.b16 %v167
    %v449 = vunpack.c.l.b16 %v168
    %v450 = vunpack.c.h.b16 %v168
    %v451 = vunpack.c.l.b16 %v169
    %v452 = vunpack.c.h.b16 %v169
    %v453 = vunpack.c.l.b16 %v170
    %v454 = vunpack.c.h.b16 %v170
    %v455 = vunpack.c.l.b16 %v171
    %v456 = vunpack.c.h.b16 %v171
    %v457 = vunpack.c.l.b16 %v172
    %v458 = vunpack.c.h.b16 %v172
    %v459 = vunpack.c.l.b16 %v173
    %v460 = vunpack.c.h.b16 %v173
    %v461 = vunpack.c.l.b16 %v174
    %v462 = vunpack.c.h.b16 %v174
    %v463 = vunpack.c.l.b16 %v175
    %v464 = vunpack.c.h.b16 %v175
    %v465 = vunpack.c.l.b16 %v176
    %v466 = vunpack.c.h.b16 %v176
    %v467 = vunpack.c.l.b16 %v177
    %v468 = vunpack.c.h.b16 %v177
    %v469 = vunpack.c.l.b16 %v178
    %v470 = vunpack.c.h.b16 %v178
    %v471 = vunpack.c.l.b16 %v179
    %v472 = vunpack.c.h.b16 %v179
    %v473 = vunpack.c.l.b16 %v180
    %v474 = vunpack.c.h.b16 %v180
    %v475 = vunpack.c.l.b16 %v181
    %v476 = vunpack.c.h.b16 %v181
    %v477 = vunpack.c.l.b16 %v182
    %v478 = vunpack.c.h.b16 %v182
    %v479 = vunpack.c.l.b16 %v183
    %v480 = vunpack.c.h.b16 %v183
    %v481 = vunpack.c.l.b16 %v184
    %v482 = vunpack.c.h.b16 %v184
    %v483 = vunpack.c.l.b16 %v185
    %v484 = vunpack.c.h.b16 %v185
    %v485 = vunpack.c.l.b16 %v186
    %v486 = vunpack.c.h.b16 %v186
    %v487 = vunpack.c.l.b16 %v187
    %v488 = vunpack.c.h.b16 %v187
    %v489 = vunpack.c.l.b16 %v188
    %v490 = vunpack.c.h.b16 %v188
    %v491 = vunpack.c.l.b16 %v189
    %v492 = vunpack.c.h.b16 %v189
    %v493 = vunpack.c.l.b16 %v190
    %v494 = vunpack.c.h.b16 %v190
    %v495 = vunpack.c.l.b16 %v191
    %v496 = vunpack.c.h.b16 %v191
    %v497 = vunpack.c.l.b16 %v192
    %v498 = vunpack.c.h.b16 %v192
    %v499 = vunpack.c.l.b16 %v193
    %v500 = vunpack.c.h.b16 %v193
    %v501 = vunpack.c.l.b16 %v194
    %v502 = vunpack.c.h.b16 %v194
    %v503 = vunpack.c.l.b16 %v195
    %v504 = vunpack.c.h.b16 %v195
    %v505 = vunpack.c.l.b16 %v196
    %v506 = vunpack.c.h.b16 %v196
    %v507 = vunpack.c.l.b16 %v197
    %v508 = vunpack.c.h.b16 %v197
    %v509 = vunpack.c.l.b16 %v198
    %v510 = vunpack.c.h.b16 %v198
    %v511 = vunpack.c.l.b16 %v199
    %v512 = vunpack.c.h.b16 %v199
    %v513 = vunpack.c.l.b16 %v200
    %v514 = vunpack.c.h.b16 %v200
    %v515 = vunpack.c.l.b16 %v201
    %v516 = vunpack.c.h.b16 %v201
    %v517 = vunpack.c.l.b16 %v202
    %v518 = vunpack.c.h.b16 %v202
    %v519 = vunpack.c.l.b16 %v203
    %v520 = vunpack.c.h.b16 %v203
    %v521 = vunpack.c.l.b16 %v204
    %v522 = vunpack.c.h.b16 %v204
    %v523 = vunpack.c.l.b16 %v205
    %v524 = vunpack.c.h.b16 %v205
    %v525 = vunpack.c.l.b16 %v206
    %v526 = vunpack.c.h.b16 %v206
    %v527 = vunpack.c.l.b16 %v207
    %v528 = vunpack.c.h.b16 %v207
    %v529 = vunpack.c.l.b16 %v208
    %v530 = vunpack.c.h.b16 %v208
    %v531 = vunpack.c.l.b16 %v209
    %v532 = vunpack.c.h.b16 %v209
    %v533 = vunpack.c.l.b16 %v210
    %v534 = vunpack.c.h.b16 %v210
    %v535 = vunpack.c.l.b16 %v211
    %v536 = vunpack.c.h.b16 %v211
    %v537 = vunpack.c.l.b16 %v212
    %v538 = vunpack.c.h.b16 %v212
    %v539 = vunpack.c.l.b16 %v213
    %v540 = vunpack.c.h.b16 %v213
    %v541 = vunpack.c.l.b16 %v214
    %v542 = vunpack.c.h.b16 %v214
    %v543 = vunpack.c.l.b16 %v215
    %v544 = vunpack.c.h.b16 %v215
    %v545 = vunpack.c.l.b16 %v216
    %v546 = vunpack.c.h.b16 %v216
    %v547 = vunpack.c.l.b16 %v217
    %v548 = vunpack.c.h.b16 %v217
    %v549 = vunpack.c.l.b16 %v218
    %v550 = vunpack.c.h.b16 %v218
    %v551 = vunpack.c.l.b16 %v219
    %v552 = vunpack.c.h.b16 %v219
    %v553 = vunpack.c.l.b16 %v220
    %v554 = vunpack.c.h.b16 %v220
    %v555 = vunpack.c.l.b16 %v221
    %v556 = vunpack.c.h.b16 %v221
    %v557 = vunpack.c.l.b16 %v222
    %v558 = vunpack.c.h.b16 %v222
    %v559 = vunpack.c.l.b16 %v223
    %v560 = vunpack.c.h.b16 %v223
    %v561 = vunpack.c.l.b16 %v224
    %v562 = vunpack.c.h.b16 %v224
    %v563 = vunpack.c.l.b16 %v225
    %v564 = vunpack.c.h.b16 %v225
    %v565 = vunpack.c.l.b16 %v226
    %v566 = vunpack.c.h.b16 %v226
    %v567 = vunpack.c.l.b16 %v227
    %v568 = vunpack.c.h.b16 %v227
    %v569 = vunpack.c.l.b16 %v228
    %v570 = vunpack.c.h.b16 %v228
    %v571 = vunpack.c.l.b16 %v229
    %v572 = vunpack.c.h.b16 %v229
    %v573 = vunpack.c.l.b16 %v230
    %v574 = vunpack.c.h.b16 %v230
    %v575 = vunpack.c.l.b16 %v231
    %v576 = vunpack.c.h.b16 %v231
    %v577 = vunpack.c.l.b16 %v232
    %v578 = vunpack.c.h.b16 %v232
    %v579 = vunpack.c.l.b16 %v233
    %v580 = vunpack.c.h.b16 %v233
    %v581 = vunpack.c.l.b16 %v234
    %v582 = vunpack.c.h.b16 %v234
    %v583 = vunpack.c.l.b16 %v235
    %v584 = vunpack.c.h.b16 %v235
    %v585 = vunpack.c.l.b16 %v236
    %v586 = vunpack.c.h.b16 %v236
    %v587 = vunpack.c.l.b16 %v237
    %v588 = vunpack.c.h.b16 %v237
    %v589 = vunpack.c.l.b16 %v238
    %v590 = vunpack.c.h.b16 %v238
    %v591 = vunpack.c.l.b16 %v239
    %v592 = vunpack.c.h.b16 %v239
    %v593 = vunpack.c.l.b16 %v240
    %v594 = vunpack.c.h.b16 %v240
    %v595 = vunpack.c.l.b16 %v241
    %v596 = vunpack.c.h.b16 %v241
    %v597 = vunpack.c.l.b16 %v242
    %v598 = vunpack.c.h.b16 %v242
    %v599 = vunpack.c.l.b16 %v243
    %v600 = vunpack.c.h.b16 %v243
    %v601 = vunpack.c.l.b16 %v244
    %v602 = vunpack.c.h.b16 %v244
    %v603 = vunpack.c.l.b16 %v245
    %v604 = vunpack.c.h.b16 %v245
    %v605 = vunpack.c.l.b16 %v246
    %v606 = vunpack.c.h.b16 %v246
    %v607 = vunpack.c.l.b16 %v247
    %v608 = vunpack.c.h.b16 %v247
    %v609 = vunpack.c.l.b16 %v248
    %v610 = vunpack.c.h.b16 %v248
    %v611 = vunpack.c.l.b16 %v249
    %v612 = vunpack.c.h.b16 %v249
    %v613 = vunpack.c.l.b16 %v250
    %v614 = vunpack.c.h.b16 %v250
    %v615 = vunpack.c.l.b16 %v251
    %v616 = vunpack.c.h.b16 %v251
    %v617 = vunpack.c.l.b16 %v252
    %v618 = vunpack.c.h.b16 %v252
    %v619 = vunpack.c.l.b16 %v253
    %v620 = vunpack.c.h.b16 %v253
    %v621 = vunpack.c.l.b16 %v254
    %v622 = vunpack.c.h.b16 %v254
    %v623 = vunpack.c.l.b16 %v255
    %v624 = vunpack.c.h.b16 %v255
    %v625 = vunpack.c.l.b16 %v256
    %v626 = vunpack.c.h.b16 %v256
    %v627 = vunpack.c.l.b16 %v257
    %v628 = vunpack.c.h.b16 %v257
    %v629 = vunpack.c.l.b16 %v258
    %v630 = vunpack.c.h.b16 %v258
    %v631 = vunpack.c.l.b16 %v259
    %v632 = vunpack.c.h.b16 %v259
    %v633 = vunpack.c.l.b16 %v260
    %v634 = vunpack.c.h.b16 %v260
    %v635 = vunpack.c.l.b16 %v261
    %v636 = vunpack.c.h.b16 %v261
    %v637 = vunpack.c.l.b16 %v262
    %v638 = vunpack.c.h.b16 %v262
    %v639 = vunpack.c.l.b16 %v263
    %v640 = vunpack.c.h.b16 %v263
    %v641 = vunpack.c.l.b16 %v264
    %v642 = vunpack.c.h.b16 %v264
    %v643 = vunpack.c.l.b16 %v265
    %v644 = vunpack.c.h.b16 %v265
    %v645 = vunpack.c.l.b16 %v266
    %v646 = vunpack.c.h.b16 %v266
    %v647 = vunpack.c.l.b16 %v267
    %v648 = vunpack.c.h.b16 %v267
    %v649 = vunpack.c.l.b16 %v268
    %v650 = vunpack.c.h.b16 %v268
    %v651 = vunpack.c.l.b16 %v269
    %v652 = vunpack.c.h.b16 %v269
    %v653 = vunpack.c.l.b16 %v270
    %v654 = vunpack.c.h.b16 %v270
    %v655 = vpack.c.b16 %v403, %v399
    %v656 = vpack.c.b16 %v404, %v400
    %v657 = vpack.c.b16 %v405, %v401
    %v658 = vpack.c.b16 %v406, %v402
    %v659 = vpack.c.b16 %v411, %v407
    %v660 = vpack.c.b16 %v412, %v408
    %v661 = vpack.c.b16 %v413, %v409
    %v662 = vpack.c.b16 %v414, %v410
    %v663 = vpack.c.b16 %v419, %v415
    %v664 = vpack.c.b16 %v420, %v416
    %v665 = vpack.c.b16 %v421, %v417
    %v666 = vpack.c.b16 %v422, %v418
    %v667 = vpack.c.b16 %v427, %v423
    %v668 = vpack.c.b16 %v428, %v424
    %v669 = vpack.c.b16 %v429, %v425
    %v670 = vpack.c.b16 %v430, %v426
    %v671 = vpack.c.b16 %v435, %v431
    %v672 = vpack.c.b16 %v436, %v432
    %v673 = vpack.c.b16 %v437, %v433
    %v674 = vpack.c.b16 %v438, %v434
    %v675 = vpack.c.b16 %v443, %v439
    %v676 = vpack.c.b16 %v444, %v440
    %v677 = vpack.c.b16 %v445, %v441
    %v678 = vpack.c.b16 %v446, %v442
    %v679 = vpack.c.b16 %v451, %v447
    %v680 = vpack.c.b16 %v452, %v448
    %v681 = vpack.c.b16 %v453, %v449
    %v682 = vpack.c.b16 %v454, %v450
    %v683 = vpack.c.b16 %v459, %v455
    %v684 = vpack.c.b16 %v460, %v456
    %v685 = vpack.c.b16 %v461, %v457
    %v686 = vpack.c.b16 %v462, %v458
    %v687 = vpack.c.b16 %v467, %v463
    %v688 = vpack.c.b16 %v468, %v464
    %v689 = vpack.c.b16 %v469, %v465
    %v690 = vpack.c.b16 %v470, %v466
    %v691 = vpack.c.b16 %v475, %v471
    %v692 = vpack.c.b16 %v476, %v472
    %v693 = vpack.c.b16 %v477, %v473
    %v694 = vpack.c.b16 %v478, %v474
    %v695 = vpack.c.b16 %v483, %v479
    %v696 = vpack.c.b16 %v484, %v480
    %v697 = vpack.c.b16 %v485, %v481
    %v698 = vpack.c.b16 %v486, %v482
    %v699 = vpack.c.b16 %v491, %v487
    %v700 = vpack.c.b16 %v492, %v488
    %v701 = vpack.c.b16 %v493, %v489
    %v702 = vpack.c.b16 %v494, %v490
    %v703 = vpack.c.b16 %v499, %v495
    %v704 = vpack.c.b16 %v500, %v496
    %v705 = vpack.c.b16 %v501, %v497
    %v706 = vpack.c.b16 %v502, %v498
    %v707 = vpack.c.b16 %v507, %v503
    %v708 = vpack.c.b16 %v508, %v504
    %v709 = vpack.c.b16 %v509, %v505
    %v710 = vpack.c.b16 %v510, %v506
    %v711 = vpack.c.b16 %v515, %v511
    %v712 = vpack.c.b16 %v516, %v512
    %v713 = vpack.c.b16 %v517, %v513
    %v714 = vpack.c.b16 %v518, %v514
    %v715 = vpack.c.b16 %v523, %v519
    %v716 = vpack.c.b16 %v524, %v520
    %v717 = vpack.c.b16 %v525, %v521
    %v718 = vpack.c.b16 %v526, %v522
    %v719 = vpack.c.b16 %v531, %v527
    %v720 = vpack.c.b16 %v532, %v528
    %v721 = vpack.c.b16 %v533, %v529
    %v722 = vpack.c.b16 %v534, %v530
    %v723 = vpack.c.b16 %v539, %v535
    %v724 = vpack.c.b16 %v540, %v536
    %v725 = vpack.c.b16 %v541, %v537
    %v726 = vpack.c.b16 %v542, %v538
    %v727 = vpack.c.b16 %v547, %v543
    %v728 = vpack.c.b16 %v548, %v544
    %v729 = vpack.c.b16 %v549, %v545
    %v730 = vpack.c.b16 %v550, %v546
    %v731 = vpack.c.b16 %v555, %v551
    %v732 = vpack.c.b16 %v556, %v552
    %v733 = vpack.c.b16 %v557, %v553
    %v734 = vpack.c.b16 %v558, %v554
    %v735 = vpack.c.b16 %v563, %v559
    %v736 = vpack.c.b16 %v564, %v560
    %v737 = vpack.c.b16 %v565, %v561
    %v738 = vpack.c.b16 %v566, %v562
    %v739 = vpack.c.b16 %v571, %v567
    %v740 = vpack.c.b16 %v572, %v568
    %v741 = vpack.c.b16 %v573, %v569
    %v742 = vpack.c.b16 %v574, %v570
    %v743 = vpack.c.b16 %v579, %v575
    %v744 = vpack.c.b16 %v580, %v576
    %v745 = vpack.c.b16 %v581, %v577
    %v746 = vpack.c.b16 %v582, %v578
    %v747 = vpack.c.b16 %v587, %v583
    %v748 = vpack.c.b16 %v588, %v584
    %v749 = vpack.c.b16 %v589, %v585
    %v750 = vpack.c.b16 %v590, %v586
    %v751 = vpack.c.b16 %v595, %v591
    %v752 = vpack.c.b16 %v596, %v592
    %v753 = vpack.c.b16 %v597, %v593
    %v754 = vpack.c.b16 %v598, %v594
    %v755 = vpack.c.b16 %v603, %v599
    %v756 = vpack.c.b16 %v604, %v600
    %v757 = vpack.c.b16 %v605, %v601
    %v758 = vpack.c.b16 %v606, %v602
    %v759 = vpack.c.b16 %v611, %v607
    %v760 = vpack.c.b16 %v612, %v608
    %v761 = vpack.c.b16 %v613, %v609
    %v762 = vpack.c.b16 %v614, %v610
    %v763 = vpack.c.b16 %v619, %v615
    %v764 = vpack.c.b16 %v620, %v616
    %v765 = vpack.c.b16 %v621, %v617
    %v766 = vpack.c.b16 %v622, %v618
    %v767 = vpack.c.b16 %v627, %v623
    %v768 = vpack.c.b16 %v628, %v624
    %v769 = vpack.c.b16 %v629, %v625
    %v770 = vpack.c.b16 %v630, %v626
    %v771 = vpack.c.b16 %v635, %v631
    %v772 = vpack.c.b16 %v636, %v632
    %v773 = vpack.c.b16 %v637, %v633
    %v774 = vpack.c.b16 %v638, %v634
    %v775 = vpack.c.b16 %v643, %v639
    %v776 = vpack.c.b16 %v644, %v640
    %v777 = vpack.c.b16 %v645, %v641
    %v778 = vpack.c.b16 %v646, %v642
    %v779 = vpack.c.b16 %v651, %v647
    %v780 = vpack.c.b16 %v652, %v648
    %v781 = vpack.c.b16 %v653, %v649
    %v782 = vpack.c.b16 %v654, %v650
    %911 = vmatprep.subr.bf16.mxu0 %v656
    %912 = vmatpush1.bf16.msra.mxu0 %v655
    %913 = vmatprep.subr.bf16.mxu0 %v660
    %914 = vmatpush1.bf16.msra.mxu0 %v659
    %915 = vmatprep.subr.bf16.mxu0 %v664
    %916 = vmatpush1.bf16.msra.mxu0 %v663
    %917 = vmatprep.subr.bf16.mxu0 %v668
    %918 = vmatpush1.bf16.msra.mxu0 %v667
    %919 = vmatprep.subr.bf16.mxu0 %v672
    %920 = vmatpush1.bf16.msra.mxu0 %v671
    %921 = vmatprep.subr.bf16.mxu0 %v676
    %922 = vmatpush1.bf16.msra.mxu0 %v675
    %923 = vmatprep.subr.bf16.mxu0 %v680
    %924 = vmatpush1.bf16.msra.mxu0 %v679
    %925 = vmatprep.subr.bf16.mxu0 %v684
    %926 = vmatpush1.bf16.msra.mxu0 %v683
    %927 = vmatprep.subr.bf16.mxu0 %v688
    %928 = vmatpush1.bf16.msra.mxu0 %v687
    %929 = vmatprep.subr.bf16.mxu0 %v692
    %930 = vmatpush1.bf16.msra.mxu0 %v691
    %931 = vmatprep.subr.bf16.mxu0 %v696
    %932 = vmatpush1.bf16.msra.mxu0 %v695
    %933 = vmatprep.subr.bf16.mxu0 %v700
    %934 = vmatpush1.bf16.msra.mxu0 %v699
    %935 = vmatprep.subr.bf16.mxu0 %v704
    %936 = vmatpush1.bf16.msra.mxu0 %v703
    %937 = vmatprep.subr.bf16.mxu0 %v708
    %938 = vmatpush1.bf16.msra.mxu0 %v707
    %939 = vmatprep.subr.bf16.mxu0 %v712
    %940 = vmatpush1.bf16.msra.mxu0 %v711
    %941 = vmatprep.subr.bf16.mxu0 %v716
    %942 = vmatpush1.bf16.msra.mxu0 %v715
    %943 = vmatprep.mubr.bf16.mxu0 %v112
    %944 = vmatmul.mubr.bf16.gmra.mrb[0].mxu0 %v111
    %v945 = vpop.f32.mrb[0].mxu0
    %v946 = vadd.f32 0.0, %v945
    %v947 = vpop.f32.mrb[0].mxu0
    %v948 = vadd.f32 0.0, %v947
    %v949 = vpop.f32.mrb[0].mxu0
    %v950 = vadd.f32 0.0, %v949
    %v951 = vpop.f32.mrb[0].mxu0
    %v952 = vadd.f32 0.0, %v951
    %953 = vmatprep.mubr.bf16.mxu0 %v116
    %954 = vmatmul.mubr.bf16.gmra.mrb[0].mxu0 %v115
    %v955 = vpop.f32.mrb[0].mxu0
    %v956 = vadd.f32 0.0, %v955
    %v957 = vpop.f32.mrb[0].mxu0
    %v958 = vadd.f32 0.0, %v957
    %v959 = vpop.f32.mrb[0].mxu0
    %v960 = vadd.f32 0.0, %v959
    %v961 = vpop.f32.mrb[0].mxu0
    %v962 = vadd.f32 0.0, %v961
    %963 = vmatprep.mubr.bf16.mxu0 %v120
    %964 = vmatmul.mubr.bf16.gmra.mrb[0].mxu0 %v119
    %v965 = vpop.f32.mrb[0].mxu0
    %v966 = vadd.f32 0.0, %v965
    %v967 = vpop.f32.mrb[0].mxu0
    %v968 = vadd.f32 0.0, %v967
    %v969 = vpop.f32.mrb[0].mxu0
    %v970 = vadd.f32 0.0, %v969
    %v971 = vpop.f32.mrb[0].mxu0
    %v972 = vadd.f32 0.0, %v971
    %973 = vmatprep.mubr.bf16.mxu0 %v124
    %974 = vmatmul.mubr.bf16.gmra.mrb[0].mxu0 %v123
    %v975 = vpop.f32.mrb[0].mxu0
    %v976 = vadd.f32 0.0, %v975
    %v977 = vpop.f32.mrb[0].mxu0
    %v978 = vadd.f32 0.0, %v977
    %v979 = vpop.f32.mrb[0].mxu0
    %v980 = vadd.f32 0.0, %v979
    %v981 = vpop.f32.mrb[0].mxu0
    %v982 = vadd.f32 0.0, %v981
    %983 = vmatprep.mubr.bf16.mxu0 %v128
    %984 = vmatmul.mubr.bf16.gmra.mrb[0].mxu0 %v127
    %v985 = vpop.f32.mrb[0].mxu0
    %v986 = vadd.f32 0.0, %v985
    %v987 = vpop.f32.mrb[0].mxu0
    %v988 = vadd.f32 0.0, %v987
    %v989 = vpop.f32.mrb[0].mxu0
    %v990 = vadd.f32 0.0, %v989
    %v991 = vpop.f32.mrb[0].mxu0
    %v992 = vadd.f32 0.0, %v991
    %993 = vmatprep.mubr.bf16.mxu0 %v132
    %994 = vmatmul.mubr.bf16.gmra.mrb[0].mxu0 %v131
    %v995 = vpop.f32.mrb[0].mxu0
    %v996 = vadd.f32 0.0, %v995
    %v997 = vpop.f32.mrb[0].mxu0
    %v998 = vadd.f32 0.0, %v997
    %v999 = vpop.f32.mrb[0].mxu0
    %v1000 = vadd.f32 0.0, %v999
    %v1001 = vpop.f32.mrb[0].mxu0
    %v1002 = vadd.f32 0.0, %v1001
    %1003 = vmatprep.mubr.bf16.mxu0 %v136
    %1004 = vmatmul.mubr.bf16.gmra.mrb[0].mxu0 %v135
    %v1005 = vpop.f32.mrb[0].mxu0
    %v1006 = vadd.f32 0.0, %v1005
    %v1007 = vpop.f32.mrb[0].mxu0
    %v1008 = vadd.f32 0.0, %v1007
    %v1009 = vpop.f32.mrb[0].mxu0
    %v1010 = vadd.f32 0.0, %v1009
    %v1011 = vpop.f32.mrb[0].mxu0
    %v1012 = vadd.f32 0.0, %v1011
    %1013 = vmatprep.mubr.bf16.mxu0 %v140
    %1014 = vmatmul.mubr.bf16.gmra.mrb[0].mxu0 %v139
    %v1015 = vpop.f32.mrb[0].mxu0
    %v1016 = vadd.f32 0.0, %v1015
    %v1017 = vpop.f32.mrb[0].mxu0
    %v1018 = vadd.f32 0.0, %v1017
    %v1019 = vpop.f32.mrb[0].mxu0
    %v1020 = vadd.f32 0.0, %v1019
    %v1021 = vpop.f32.mrb[0].mxu0
    %v1022 = vadd.f32 0.0, %v1021
    %1023 = vdwg.mxu0
    %1024 = vmatprep.subr.bf16.mxu0 %v720
    %1025 = vmatpush1.bf16.msra.mxu0 %v719
    %1026 = vmatprep.subr.bf16.mxu0 %v724
    %1027 = vmatpush1.bf16.msra.mxu0 %v723
    %1028 = vmatprep.subr.bf16.mxu0 %v728
    %1029 = vmatpush1.bf16.msra.mxu0 %v727
    %1030 = vmatprep.subr.bf16.mxu0 %v732
    %1031 = vmatpush1.bf16.msra.mxu0 %v731
    %1032 = vmatprep.subr.bf16.mxu0 %v736
    %1033 = vmatpush1.bf16.msra.mxu0 %v735
    %1034 = vmatprep.subr.bf16.mxu0 %v740
    %1035 = vmatpush1.bf16.msra.mxu0 %v739
    %1036 = vmatprep.subr.bf16.mxu0 %v744
    %1037 = vmatpush1.bf16.msra.mxu0 %v743
    %1038 = vmatprep.subr.bf16.mxu0 %v748
    %1039 = vmatpush1.bf16.msra.mxu0 %v747
    %1040 = vmatprep.subr.bf16.mxu0 %v752
    %1041 = vmatpush1.bf16.msra.mxu0 %v751
    %1042 = vmatprep.subr.bf16.mxu0 %v756
    %1043 = vmatpush1.bf16.msra.mxu0 %v755
    %1044 = vmatprep.subr.bf16.mxu0 %v760
    %1045 = vmatpush1.bf16.msra.mxu0 %v759
    %1046 = vmatprep.subr.bf16.mxu0 %v764
    %1047 = vmatpush1.bf16.msra.mxu0 %v763
    %1048 = vmatprep.subr.bf16.mxu0 %v768
    %1049 = vmatpush1.bf16.msra.mxu0 %v767
    %1050 = vmatprep.subr.bf16.mxu0 %v772
    %1051 = vmatpush1.bf16.msra.mxu0 %v771
    %1052 = vmatprep.subr.bf16.mxu0 %v776
    %1053 = vmatpush1.bf16.msra.mxu0 %v775
    %1054 = vmatprep.subr.bf16.mxu0 %v780
    %1055 = vmatpush1.bf16.msra.mxu0 %v779
    %1056 = vmatprep.mubr.bf16.mxu0 %v114
    %1057 = vmatmul.mubr.bf16.gmra.mrb[0].mxu0 %v113
    %v1058 = vpop.f32.mrb[0].mxu0
    %v1059 = vadd.f32 %v946, %v1058
    %v1060 = vpop.f32.mrb[0].mxu0
    %v1061 = vadd.f32 %v948, %v1060
    %v1062 = vpop.f32.mrb[0].mxu0
    %v1063 = vadd.f32 %v950, %v1062
    %v1064 = vpop.f32.mrb[0].mxu0
    %v1065 = vadd.f32 %v952, %v1064
    %1066 = vmatprep.mubr.bf16.mxu0 %v118
    %1067 = vmatmul.mubr.bf16.gmra.mrb[0].mxu0 %v117
    %v1068 = vpop.f32.mrb[0].mxu0
    %v1069 = vadd.f32 %v956, %v1068
    %v1070 = vpop.f32.mrb[0].mxu0
    %v1071 = vadd.f32 %v958, %v1070
    %v1072 = vpop.f32.mrb[0].mxu0
    %v1073 = vadd.f32 %v960, %v1072
    %v1074 = vpop.f32.mrb[0].mxu0
    %v1075 = vadd.f32 %v962, %v1074
    %1076 = vmatprep.mubr.bf16.mxu0 %v122
    %1077 = vmatmul.mubr.bf16.gmra.mrb[0].mxu0 %v121
    %v1078 = vpop.f32.mrb[0].mxu0
    %v1079 = vadd.f32 %v966, %v1078
    %v1080 = vpop.f32.mrb[0].mxu0
    %v1081 = vadd.f32 %v968, %v1080
    %v1082 = vpop.f32.mrb[0].mxu0
    %v1083 = vadd.f32 %v970, %v1082
    %v1084 = vpop.f32.mrb[0].mxu0
    %v1085 = vadd.f32 %v972, %v1084
    %1086 = vmatprep.mubr.bf16.mxu0 %v126
    %1087 = vmatmul.mubr.bf16.gmra.mrb[0].mxu0 %v125
    %v1088 = vpop.f32.mrb[0].mxu0
    %v1089 = vadd.f32 %v976, %v1088
    %v1090 = vpop.f32.mrb[0].mxu0
    %v1091 = vadd.f32 %v978, %v1090
    %v1092 = vpop.f32.mrb[0].mxu0
    %v1093 = vadd.f32 %v980, %v1092
    %v1094 = vpop.f32.mrb[0].mxu0
    %v1095 = vadd.f32 %v982, %v1094
    %1096 = vmatprep.mubr.bf16.mxu0 %v130
    %1097 = vmatmul.mubr.bf16.gmra.mrb[0].mxu0 %v129
    %v1098 = vpop.f32.mrb[0].mxu0
    %v1099 = vadd.f32 %v986, %v1098
    %v1100 = vpop.f32.mrb[0].mxu0
    %v1101 = vadd.f32 %v988, %v1100
    %v1102 = vpop.f32.mrb[0].mxu0
    %v1103 = vadd.f32 %v990, %v1102
    %v1104 = vpop.f32.mrb[0].mxu0
    %v1105 = vadd.f32 %v992, %v1104
    %1106 = vmatprep.mubr.bf16.mxu0 %v134
    %1107 = vmatmul.mubr.bf16.gmra.mrb[0].mxu0 %v133
    %v1108 = vpop.f32.mrb[0].mxu0
    %v1109 = vadd.f32 %v996, %v1108
    %v1110 = vpop.f32.mrb[0].mxu0
    %v1111 = vadd.f32 %v998, %v1110
    %v1112 = vpop.f32.mrb[0].mxu0
    %v1113 = vadd.f32 %v1000, %v1112
    %v1114 = vpop.f32.mrb[0].mxu0
    %v1115 = vadd.f32 %v1002, %v1114
    %1116 = vmatprep.mubr.bf16.mxu0 %v138
    %1117 = vmatmul.mubr.bf16.gmra.mrb[0].mxu0 %v137
    %v1118 = vpop.f32.mrb[0].mxu0
    %v1119 = vadd.f32 %v1006, %v1118
    %v1120 = vpop.f32.mrb[0].mxu0
    %v1121 = vadd.f32 %v1008, %v1120
    %v1122 = vpop.f32.mrb[0].mxu0
    %v1123 = vadd.f32 %v1010, %v1122
    %v1124 = vpop.f32.mrb[0].mxu0
    %v1125 = vadd.f32 %v1012, %v1124
    %1126 = vmatprep.mubr.bf16.mxu0 %v142
    %1127 = vmatmul.mubr.bf16.gmra.mrb[0].mxu0 %v141
    %v1128 = vpop.f32.mrb[0].mxu0
    %v1129 = vadd.f32 %v1016, %v1128
    %v1130 = vpop.f32.mrb[0].mxu0
    %v1131 = vadd.f32 %v1018, %v1130
    %v1132 = vpop.f32.mrb[0].mxu0
    %v1133 = vadd.f32 %v1020, %v1132
    %v1134 = vpop.f32.mrb[0].mxu0
    %v1135 = vadd.f32 %v1022, %v1134
    %1136 = vdwg.mxu0
    %1137 = vmatprep.subr.bf16.mxu0 %v658
    %1138 = vmatpush1.bf16.msra.mxu0 %v657
    %1139 = vmatprep.subr.bf16.mxu0 %v662
    %1140 = vmatpush1.bf16.msra.mxu0 %v661
    %1141 = vmatprep.subr.bf16.mxu0 %v666
    %1142 = vmatpush1.bf16.msra.mxu0 %v665
    %1143 = vmatprep.subr.bf16.mxu0 %v670
    %1144 = vmatpush1.bf16.msra.mxu0 %v669
    %1145 = vmatprep.subr.bf16.mxu0 %v674
    %1146 = vmatpush1.bf16.msra.mxu0 %v673
    %1147 = vmatprep.subr.bf16.mxu0 %v678
    %1148 = vmatpush1.bf16.msra.mxu0 %v677
    %1149 = vmatprep.subr.bf16.mxu0 %v682
    %1150 = vmatpush1.bf16.msra.mxu0 %v681
    %1151 = vmatprep.subr.bf16.mxu0 %v686
    %1152 = vmatpush1.bf16.msra.mxu0 %v685
    %1153 = vmatprep.subr.bf16.mxu0 %v690
    %1154 = vmatpush1.bf16.msra.mxu0 %v689
    %1155 = vmatprep.subr.bf16.mxu0 %v694
    %1156 = vmatpush1.bf16.msra.mxu0 %v693
    %1157 = vmatprep.subr.bf16.mxu0 %v698
    %1158 = vmatpush1.bf16.msra.mxu0 %v697
    %1159 = vmatprep.subr.bf16.mxu0 %v702
    %1160 = vmatpush1.bf16.msra.mxu0 %v701
    %1161 = vmatprep.subr.bf16.mxu0 %v706
    %1162 = vmatpush1.bf16.msra.mxu0 %v705
    %1163 = vmatprep.subr.bf16.mxu0 %v710
    %1164 = vmatpush1.bf16.msra.mxu0 %v709
    %1165 = vmatprep.subr.bf16.mxu0 %v714
    %1166 = vmatpush1.bf16.msra.mxu0 %v713
    %1167 = vmatprep.subr.bf16.mxu0 %v718
    %1168 = vmatpush1.bf16.msra.mxu0 %v717
    %1169 = vmatprep.mubr.bf16.mxu0 %v112
    %1170 = vmatmul.mubr.bf16.gmra.mrb[0].mxu0 %v111
    %v1171 = vpop.f32.mrb[0].mxu0
    %v1172 = vadd.f32 0.0, %v1171
    %v1173 = vpop.f32.mrb[0].mxu0
    %v1174 = vadd.f32 0.0, %v1173
    %v1175 = vpop.f32.mrb[0].mxu0
    %v1176 = vadd.f32 0.0, %v1175
    %v1177 = vpop.f32.mrb[0].mxu0
    %v1178 = vadd.f32 0.0, %v1177
    %1179 = vmatprep.mubr.bf16.mxu0 %v116
    %1180 = vmatmul.mubr.bf16.gmra.mrb[0].mxu0 %v115
    %v1181 = vpop.f32.mrb[0].mxu0
    %v1182 = vadd.f32 0.0, %v1181
    %v1183 = vpop.f32.mrb[0].mxu0
    %v1184 = vadd.f32 0.0, %v1183
    %v1185 = vpop.f32.mrb[0].mxu0
    %v1186 = vadd.f32 0.0, %v1185
    %v1187 = vpop.f32.mrb[0].mxu0
    %v1188 = vadd.f32 0.0, %v1187
    %1189 = vmatprep.mubr.bf16.mxu0 %v120
    %1190 = vmatmul.mubr.bf16.gmra.mrb[0].mxu0 %v119
    %v1191 = vpop.f32.mrb[0].mxu0
    %v1192 = vadd.f32 0.0, %v1191
    %v1193 = vpop.f32.mrb[0].mxu0
    %v1194 = vadd.f32 0.0, %v1193
    %v1195 = vpop.f32.mrb[0].mxu0
    %v1196 = vadd.f32 0.0, %v1195
    %v1197 = vpop.f32.mrb[0].mxu0
    %v1198 = vadd.f32 0.0, %v1197
    %1199 = vmatprep.mubr.bf16.mxu0 %v124
    %1200 = vmatmul.mubr.bf16.gmra.mrb[0].mxu0 %v123
    %v1201 = vpop.f32.mrb[0].mxu0
    %v1202 = vadd.f32 0.0, %v1201
    %v1203 = vpop.f32.mrb[0].mxu0
    %v1204 = vadd.f32 0.0, %v1203
    %v1205 = vpop.f32.mrb[0].mxu0
    %v1206 = vadd.f32 0.0, %v1205
    %v1207 = vpop.f32.mrb[0].mxu0
    %v1208 = vadd.f32 0.0, %v1207
    %1209 = vmatprep.mubr.bf16.mxu0 %v128
    %1210 = vmatmul.mubr.bf16.gmra.mrb[0].mxu0 %v127
    %v1211 = vpop.f32.mrb[0].mxu0
    %v1212 = vadd.f32 0.0, %v1211
    %v1213 = vpop.f32.mrb[0].mxu0
    %v1214 = vadd.f32 0.0, %v1213
    %v1215 = vpop.f32.mrb[0].mxu0
    %v1216 = vadd.f32 0.0, %v1215
    %v1217 = vpop.f32.mrb[0].mxu0
    %v1218 = vadd.f32 0.0, %v1217
    %1219 = vmatprep.mubr.bf16.mxu0 %v132
    %1220 = vmatmul.mubr.bf16.gmra.mrb[0].mxu0 %v131
    %v1221 = vpop.f32.mrb[0].mxu0
    %v1222 = vadd.f32 0.0, %v1221
    %v1223 = vpop.f32.mrb[0].mxu0
    %v1224 = vadd.f32 0.0, %v1223
    %v1225 = vpop.f32.mrb[0].mxu0
    %v1226 = vadd.f32 0.0, %v1225
    %v1227 = vpop.f32.mrb[0].mxu0
    %v1228 = vadd.f32 0.0, %v1227
    %1229 = vmatprep.mubr.bf16.mxu0 %v136
    %1230 = vmatmul.mubr.bf16.gmra.mrb[0].mxu0 %v135
    %v1231 = vpop.f32.mrb[0].mxu0
    %v1232 = vadd.f32 0.0, %v1231
    %v1233 = vpop.f32.mrb[0].mxu0
    %v1234 = vadd.f32 0.0, %v1233
    %v1235 = vpop.f32.mrb[0].mxu0
    %v1236 = vadd.f32 0.0, %v1235
    %v1237 = vpop.f32.mrb[0].mxu0
    %v1238 = vadd.f32 0.0, %v1237
    %1239 = vmatprep.mubr.bf16.mxu0 %v140
    %1240 = vmatmul.mubr.bf16.gmra.mrb[0].mxu0 %v139
    %v1241 = vpop.f32.mrb[0].mxu0
    %v1242 = vadd.f32 0.0, %v1241
    %v1243 = vpop.f32.mrb[0].mxu0
    %v1244 = vadd.f32 0.0, %v1243
    %v1245 = vpop.f32.mrb[0].mxu0
    %v1246 = vadd.f32 0.0, %v1245
    %v1247 = vpop.f32.mrb[0].mxu0
    %v1248 = vadd.f32 0.0, %v1247
    %1249 = vdwg.mxu0
    %1250 = vmatprep.subr.bf16.mxu0 %v722
    %1251 = vmatpush1.bf16.msra.mxu0 %v721
    %1252 = vmatprep.subr.bf16.mxu0 %v726
    %1253 = vmatpush1.bf16.msra.mxu0 %v725
    %1254 = vmatprep.subr.bf16.mxu0 %v730
    %1255 = vmatpush1.bf16.msra.mxu0 %v729
    %1256 = vmatprep.subr.bf16.mxu0 %v734
    %1257 = vmatpush1.bf16.msra.mxu0 %v733
    %1258 = vmatprep.subr.bf16.mxu0 %v738
    %1259 = vmatpush1.bf16.msra.mxu0 %v737
    %1260 = vmatprep.subr.bf16.mxu0 %v742
    %1261 = vmatpush1.bf16.msra.mxu0 %v741
    %1262 = vmatprep.subr.bf16.mxu0 %v746
    %1263 = vmatpush1.bf16.msra.mxu0 %v745
    %1264 = vmatprep.subr.bf16.mxu0 %v750
    %1265 = vmatpush1.bf16.msra.mxu0 %v749
    %1266 = vmatprep.subr.bf16.mxu0 %v754
    %1267 = vmatpush1.bf16.msra.mxu0 %v753
    %1268 = vmatprep.subr.bf16.mxu0 %v758
    %1269 = vmatpush1.bf16.msra.mxu0 %v757
    %1270 = vmatprep.subr.bf16.mxu0 %v762
    %1271 = vmatpush1.bf16.msra.mxu0 %v761
    %1272 = vmatprep.subr.bf16.mxu0 %v766
    %1273 = vmatpush1.bf16.msra.mxu0 %v765
    %1274 = vmatprep.subr.bf16.mxu0 %v770
    %1275 = vmatpush1.bf16.msra.mxu0 %v769
    %1276 = vmatprep.subr.bf16.mxu0 %v774
    %1277 = vmatpush1.bf16.msra.mxu0 %v773
    %1278 = vmatprep.subr.bf16.mxu0 %v778
    %1279 = vmatpush1.bf16.msra.mxu0 %v777
    %1280 = vmatprep.subr.bf16.mxu0 %v782
    %1281 = vmatpush1.bf16.msra.mxu0 %v781
    %1282 = vmatprep.mubr.bf16.mxu0 %v114
    %1283 = vmatmul.mubr.bf16.gmra.mrb[0].mxu0 %v113
    %v1284 = vpop.f32.mrb[0].mxu0
    %v1285 = vadd.f32 %v1172, %v1284
    %v1286 = vpop.f32.mrb[0].mxu0
    %v1287 = vadd.f32 %v1174, %v1286
    %v1288 = vpop.f32.mrb[0].mxu0
    %v1289 = vadd.f32 %v1176, %v1288
    %v1290 = vpop.f32.mrb[0].mxu0
    %v1291 = vadd.f32 %v1178, %v1290
    %1292 = vmatprep.mubr.bf16.mxu0 %v118
    %1293 = vmatmul.mubr.bf16.gmra.mrb[0].mxu0 %v117
    %v1294 = vpop.f32.mrb[0].mxu0
    %v1295 = vadd.f32 %v1182, %v1294
    %v1296 = vpop.f32.mrb[0].mxu0
    %v1297 = vadd.f32 %v1184, %v1296
    %v1298 = vpop.f32.mrb[0].mxu0
    %v1299 = vadd.f32 %v1186, %v1298
    %v1300 = vpop.f32.mrb[0].mxu0
    %v1301 = vadd.f32 %v1188, %v1300
    %1302 = vmatprep.mubr.bf16.mxu0 %v122
    %1303 = vmatmul.mubr.bf16.gmra.mrb[0].mxu0 %v121
    %v1304 = vpop.f32.mrb[0].mxu0
    %v1305 = vadd.f32 %v1192, %v1304
    %v1306 = vpop.f32.mrb[0].mxu0
    %v1307 = vadd.f32 %v1194, %v1306
    %v1308 = vpop.f32.mrb[0].mxu0
    %v1309 = vadd.f32 %v1196, %v1308
    %v1310 = vpop.f32.mrb[0].mxu0
    %v1311 = vadd.f32 %v1198, %v1310
    %1312 = vmatprep.mubr.bf16.mxu0 %v126
    %1313 = vmatmul.mubr.bf16.gmra.mrb[0].mxu0 %v125
    %v1314 = vpop.f32.mrb[0].mxu0
    %v1315 = vadd.f32 %v1202, %v1314
    %v1316 = vpop.f32.mrb[0].mxu0
    %v1317 = vadd.f32 %v1204, %v1316
    %v1318 = vpop.f32.mrb[0].mxu0
    %v1319 = vadd.f32 %v1206, %v1318
    %v1320 = vpop.f32.mrb[0].mxu0
    %v1321 = vadd.f32 %v1208, %v1320
    %1322 = vmatprep.mubr.bf16.mxu0 %v130
    %1323 = vmatmul.mubr.bf16.gmra.mrb[0].mxu0 %v129
    %v1324 = vpop.f32.mrb[0].mxu0
    %v1325 = vadd.f32 %v1212, %v1324
    %v1326 = vpop.f32.mrb[0].mxu0
    %v1327 = vadd.f32 %v1214, %v1326
    %v1328 = vpop.f32.mrb[0].mxu0
    %v1329 = vadd.f32 %v1216, %v1328
    %v1330 = vpop.f32.mrb[0].mxu0
    %v1331 = vadd.f32 %v1218, %v1330
    %1332 = vmatprep.mubr.bf16.mxu0 %v134
    %1333 = vmatmul.mubr.bf16.gmra.mrb[0].mxu0 %v133
    %v1334 = vpop.f32.mrb[0].mxu0
    %v1335 = vadd.f32 %v1222, %v1334
    %v1336 = vpop.f32.mrb[0].mxu0
    %v1337 = vadd.f32 %v1224, %v1336
    %v1338 = vpop.f32.mrb[0].mxu0
    %v1339 = vadd.f32 %v1226, %v1338
    %v1340 = vpop.f32.mrb[0].mxu0
    %v1341 = vadd.f32 %v1228, %v1340
    %1342 = vmatprep.mubr.bf16.mxu0 %v138
    %1343 = vmatmul.mubr.bf16.gmra.mrb[0].mxu0 %v137
    %v1344 = vpop.f32.mrb[0].mxu0
    %v1345 = vadd.f32 %v1232, %v1344
    %v1346 = vpop.f32.mrb[0].mxu0
    %v1347 = vadd.f32 %v1234, %v1346
    %v1348 = vpop.f32.mrb[0].mxu0
    %v1349 = vadd.f32 %v1236, %v1348
    %v1350 = vpop.f32.mrb[0].mxu0
    %v1351 = vadd.f32 %v1238, %v1350
    %1352 = vmatprep.mubr.bf16.mxu0 %v142
    %1353 = vmatmul.mubr.bf16.gmra.mrb[0].mxu0 %v141
    %v1354 = vpop.f32.mrb[0].mxu0
    %v1355 = vadd.f32 %v1242, %v1354
    %v1356 = vpop.f32.mrb[0].mxu0
    %v1357 = vadd.f32 %v1244, %v1356
    %v1358 = vpop.f32.mrb[0].mxu0
    %v1359 = vadd.f32 %v1246, %v1358
    %v1360 = vpop.f32.mrb[0].mxu0
    %v1361 = vadd.f32 %v1248, %v1360
    %1362 = vdwg.mxu0
    %v1363 = vmul.f32 %v1059, 0.2
    %v1364 = vmul.f32 %v1061, 0.2
    %v1365 = vmul.f32 %v1285, 0.2
    %v1366 = vmul.f32 %v1287, 0.2
    %v1367 = vmul.f32 %v1063, 0.2
    %v1368 = vmul.f32 %v1065, 0.2
    %v1369 = vmul.f32 %v1289, 0.2
    %v1370 = vmul.f32 %v1291, 0.2
    %v1371 = vmul.f32 %v1069, 0.2
    %v1372 = vmul.f32 %v1071, 0.2
    %v1373 = vmul.f32 %v1295, 0.2
    %v1374 = vmul.f32 %v1297, 0.2
    %v1375 = vmul.f32 %v1073, 0.2
    %v1376 = vmul.f32 %v1075, 0.2
    %v1377 = vmul.f32 %v1299, 0.2
    %v1378 = vmul.f32 %v1301, 0.2
    %v1379 = vmul.f32 %v1079, 0.2
    %v1380 = vmul.f32 %v1081, 0.2
    %v1381 = vmul.f32 %v1305, 0.2
    %v1382 = vmul.f32 %v1307, 0.2
    %v1383 = vmul.f32 %v1083, 0.2
    %v1384 = vmul.f32 %v1085, 0.2
    %v1385 = vmul.f32 %v1309, 0.2
    %v1386 = vmul.f32 %v1311, 0.2
    %v1387 = vmul.f32 %v1089, 0.2
    %v1388 = vmul.f32 %v1091, 0.2
    %v1389 = vmul.f32 %v1315, 0.2
    %v1390 = vmul.f32 %v1317, 0.2
    %v1391 = vmul.f32 %v1093, 0.2
    %v1392 = vmul.f32 %v1095, 0.2
    %v1393 = vmul.f32 %v1319, 0.2
    %v1394 = vmul.f32 %v1321, 0.2
    %v1395 = vmul.f32 %v1099, 0.2
    %v1396 = vmul.f32 %v1101, 0.2
    %v1397 = vmul.f32 %v1325, 0.2
    %v1398 = vmul.f32 %v1327, 0.2
    %v1399 = vmul.f32 %v1103, 0.2
    %v1400 = vmul.f32 %v1105, 0.2
    %v1401 = vmul.f32 %v1329, 0.2
    %v1402 = vmul.f32 %v1331, 0.2
    %v1403 = vmul.f32 %v1109, 0.2
    %v1404 = vmul.f32 %v1111, 0.2
    %v1405 = vmul.f32 %v1335, 0.2
    %v1406 = vmul.f32 %v1337, 0.2
    %v1407 = vmul.f32 %v1113, 0.2
    %v1408 = vmul.f32 %v1115, 0.2
    %v1409 = vmul.f32 %v1339, 0.2
    %v1410 = vmul.f32 %v1341, 0.2
    %v1411 = vmul.f32 %v1119, 0.2
    %v1412 = vmul.f32 %v1121, 0.2
    %v1413 = vmul.f32 %v1345, 0.2
    %v1414 = vmul.f32 %v1347, 0.2
    %v1415 = vmul.f32 %v1123, 0.2
    %v1416 = vmul.f32 %v1125, 0.2
    %v1417 = vmul.f32 %v1349, 0.2
    %v1418 = vmul.f32 %v1351, 0.2
    %v1419 = vmul.f32 %v1129, 0.2
    %v1420 = vmul.f32 %v1131, 0.2
    %v1421 = vmul.f32 %v1355, 0.2
    %v1422 = vmul.f32 %v1357, 0.2
    %v1423 = vmul.f32 %v1133, 0.2
    %v1424 = vmul.f32 %v1135, 0.2
    %v1425 = vmul.f32 %v1359, 0.2
    %v1426 = vmul.f32 %v1361, 0.2
    %v1427 = vmul.f32 %v47, 0.8
    %v1428 = vmul.f32 %v48, 0.8
    %v1429 = vmul.f32 %v49, 0.8
    %v1430 = vmul.f32 %v50, 0.8
    %v1431 = vmul.f32 %v51, 0.8
    %v1432 = vmul.f32 %v52, 0.8
    %v1433 = vmul.f32 %v53, 0.8
    %v1434 = vmul.f32 %v54, 0.8
    %v1435 = vmul.f32 %v55, 0.8
    %v1436 = vmul.f32 %v56, 0.8
    %v1437 = vmul.f32 %v57, 0.8
    %v1438 = vmul.f32 %v58, 0.8
    %v1439 = vmul.f32 %v59, 0.8
    %v1440 = vmul.f32 %v60, 0.8
    %v1441 = vmul.f32 %v61, 0.8
    %v1442 = vmul.f32 %v62, 0.8
    %v1443 = vmul.f32 %v63, 0.8
    %v1444 = vmul.f32 %v64, 0.8
    %v1445 = vmul.f32 %v65, 0.8
    %v1446 = vmul.f32 %v66, 0.8
    %v1447 = vmul.f32 %v67, 0.8
    %v1448 = vmul.f32 %v68, 0.8
    %v1449 = vmul.f32 %v69, 0.8
    %v1450 = vmul.f32 %v70, 0.8
    %v1451 = vmul.f32 %v71, 0.8
    %v1452 = vmul.f32 %v72, 0.8
    %v1453 = vmul.f32 %v73, 0.8
    %v1454 = vmul.f32 %v74, 0.8
    %v1455 = vmul.f32 %v75, 0.8
    %v1456 = vmul.f32 %v76, 0.8
    %v1457 = vmul.f32 %v77, 0.8
    %v1458 = vmul.f32 %v78, 0.8
    %v1459 = vmul.f32 %v79, 0.8
    %v1460 = vmul.f32 %v80, 0.8
    %v1461 = vmul.f32 %v81, 0.8
    %v1462 = vmul.f32 %v82, 0.8
    %v1463 = vmul.f32 %v83, 0.8
    %v1464 = vmul.f32 %v84, 0.8
    %v1465 = vmul.f32 %v85, 0.8
    %v1466 = vmul.f32 %v86, 0.8
    %v1467 = vmul.f32 %v87, 0.8
    %v1468 = vmul.f32 %v88, 0.8
    %v1469 = vmul.f32 %v89, 0.8
    %v1470 = vmul.f32 %v90, 0.8
    %v1471 = vmul.f32 %v91, 0.8
    %v1472 = vmul.f32 %v92, 0.8
    %v1473 = vmul.f32 %v93, 0.8
    %v1474 = vmul.f32 %v94, 0.8
    %v1475 = vmul.f32 %v95, 0.8
    %v1476 = vmul.f32 %v96, 0.8
    %v1477 = vmul.f32 %v97, 0.8
    %v1478 = vmul.f32 %v98, 0.8
    %v1479 = vmul.f32 %v99, 0.8
    %v1480 = vmul.f32 %v100, 0.8
    %v1481 = vmul.f32 %v101, 0.8
    %v1482 = vmul.f32 %v102, 0.8
    %v1483 = vmul.f32 %v103, 0.8
    %v1484 = vmul.f32 %v104, 0.8
    %v1485 = vmul.f32 %v105, 0.8
    %v1486 = vmul.f32 %v106, 0.8
    %v1487 = vmul.f32 %v107, 0.8
    %v1488 = vmul.f32 %v108, 0.8
    %v1489 = vmul.f32 %v109, 0.8
    %v1490 = vmul.f32 %v110, 0.8
    %v1491 = vadd.f32 %v1363, %v1427
    %v1492 = vadd.f32 %v1364, %v1428
    %v1493 = vadd.f32 %v1365, %v1429
    %v1494 = vadd.f32 %v1366, %v1430
    %v1495 = vadd.f32 %v1367, %v1431
    %v1496 = vadd.f32 %v1368, %v1432
    %v1497 = vadd.f32 %v1369, %v1433
    %v1498 = vadd.f32 %v1370, %v1434
    %v1499 = vadd.f32 %v1371, %v1435
    %v1500 = vadd.f32 %v1372, %v1436
    %v1501 = vadd.f32 %v1373, %v1437
    %v1502 = vadd.f32 %v1374, %v1438
    %v1503 = vadd.f32 %v1375, %v1439
    %v1504 = vadd.f32 %v1376, %v1440
    %v1505 = vadd.f32 %v1377, %v1441
    %v1506 = vadd.f32 %v1378, %v1442
    %v1507 = vadd.f32 %v1379, %v1443
    %v1508 = vadd.f32 %v1380, %v1444
    %v1509 = vadd.f32 %v1381, %v1445
    %v1510 = vadd.f32 %v1382, %v1446
    %v1511 = vadd.f32 %v1383, %v1447
    %v1512 = vadd.f32 %v1384, %v1448
    %v1513 = vadd.f32 %v1385, %v1449
    %v1514 = vadd.f32 %v1386, %v1450
    %v1515 = vadd.f32 %v1387, %v1451
    %v1516 = vadd.f32 %v1388, %v1452
    %v1517 = vadd.f32 %v1389, %v1453
    %v1518 = vadd.f32 %v1390, %v1454
    %v1519 = vadd.f32 %v1391, %v1455
    %v1520 = vadd.f32 %v1392, %v1456
    %v1521 = vadd.f32 %v1393, %v1457
    %v1522 = vadd.f32 %v1394, %v1458
    %v1523 = vadd.f32 %v1395, %v1459
    %v1524 = vadd.f32 %v1396, %v1460
    %v1525 = vadd.f32 %v1397, %v1461
    %v1526 = vadd.f32 %v1398, %v1462
    %v1527 = vadd.f32 %v1399, %v1463
    %v1528 = vadd.f32 %v1400, %v1464
    %v1529 = vadd.f32 %v1401, %v1465
    %v1530 = vadd.f32 %v1402, %v1466
    %v1531 = vadd.f32 %v1403, %v1467
    %v1532 = vadd.f32 %v1404, %v1468
    %v1533 = vadd.f32 %v1405, %v1469
    %v1534 = vadd.f32 %v1406, %v1470
    %v1535 = vadd.f32 %v1407, %v1471
    %v1536 = vadd.f32 %v1408, %v1472
    %v1537 = vadd.f32 %v1409, %v1473
    %v1538 = vadd.f32 %v1410, %v1474
    %v1539 = vadd.f32 %v1411, %v1475
    %v1540 = vadd.f32 %v1412, %v1476
    %v1541 = vadd.f32 %v1413, %v1477
    %v1542 = vadd.f32 %v1414, %v1478
    %v1543 = vadd.f32 %v1415, %v1479
    %v1544 = vadd.f32 %v1416, %v1480
    %v1545 = vadd.f32 %v1417, %v1481
    %v1546 = vadd.f32 %v1418, %v1482
    %v1547 = vadd.f32 %v1419, %v1483
    %v1548 = vadd.f32 %v1420, %v1484
    %v1549 = vadd.f32 %v1421, %v1485
    %v1550 = vadd.f32 %v1422, %v1486
    %v1551 = vadd.f32 %v1423, %v1487
    %v1552 = vadd.f32 %v1424, %v1488
    %v1553 = vadd.f32 %v1425, %v1489
    %v1554 = vadd.f32 %v1426, %v1490
    %v1555 = vmul.f32 %v1491, %v1491
    %v1556 = vmul.f32 %v1492, %v1492
    %v1557 = vmul.f32 %v1493, %v1493
    %v1558 = vmul.f32 %v1494, %v1494
    %v1559 = vmul.f32 %v1495, %v1495
    %v1560 = vmul.f32 %v1496, %v1496
    %v1561 = vmul.f32 %v1497, %v1497
    %v1562 = vmul.f32 %v1498, %v1498
    %v1563 = vmul.f32 %v1499, %v1499
    %v1564 = vmul.f32 %v1500, %v1500
    %v1565 = vmul.f32 %v1501, %v1501
    %v1566 = vmul.f32 %v1502, %v1502
    %v1567 = vmul.f32 %v1503, %v1503
    %v1568 = vmul.f32 %v1504, %v1504
    %v1569 = vmul.f32 %v1505, %v1505
    %v1570 = vmul.f32 %v1506, %v1506
    %v1571 = vmul.f32 %v1507, %v1507
    %v1572 = vmul.f32 %v1508, %v1508
    %v1573 = vmul.f32 %v1509, %v1509
    %v1574 = vmul.f32 %v1510, %v1510
    %v1575 = vmul.f32 %v1511, %v1511
    %v1576 = vmul.f32 %v1512, %v1512
    %v1577 = vmul.f32 %v1513, %v1513
    %v1578 = vmul.f32 %v1514, %v1514
    %v1579 = vmul.f32 %v1515, %v1515
    %v1580 = vmul.f32 %v1516, %v1516
    %v1581 = vmul.f32 %v1517, %v1517
    %v1582 = vmul.f32 %v1518, %v1518
    %v1583 = vmul.f32 %v1519, %v1519
    %v1584 = vmul.f32 %v1520, %v1520
    %v1585 = vmul.f32 %v1521, %v1521
    %v1586 = vmul.f32 %v1522, %v1522
    %v1587 = vmul.f32 %v1523, %v1523
    %v1588 = vmul.f32 %v1524, %v1524
    %v1589 = vmul.f32 %v1525, %v1525
    %v1590 = vmul.f32 %v1526, %v1526
    %v1591 = vmul.f32 %v1527, %v1527
    %v1592 = vmul.f32 %v1528, %v1528
    %v1593 = vmul.f32 %v1529, %v1529
    %v1594 = vmul.f32 %v1530, %v1530
    %v1595 = vmul.f32 %v1531, %v1531
    %v1596 = vmul.f32 %v1532, %v1532
    %v1597 = vmul.f32 %v1533, %v1533
    %v1598 = vmul.f32 %v1534, %v1534
    %v1599 = vmul.f32 %v1535, %v1535
    %v1600 = vmul.f32 %v1536, %v1536
    %v1601 = vmul.f32 %v1537, %v1537
    %v1602 = vmul.f32 %v1538, %v1538
    %v1603 = vmul.f32 %v1539, %v1539
    %v1604 = vmul.f32 %v1540, %v1540
    %v1605 = vmul.f32 %v1541, %v1541
    %v1606 = vmul.f32 %v1542, %v1542
    %v1607 = vmul.f32 %v1543, %v1543
    %v1608 = vmul.f32 %v1544, %v1544
    %v1609 = vmul.f32 %v1545, %v1545
    %v1610 = vmul.f32 %v1546, %v1546
    %v1611 = vmul.f32 %v1547, %v1547
    %v1612 = vmul.f32 %v1548, %v1548
    %v1613 = vmul.f32 %v1549, %v1549
    %v1614 = vmul.f32 %v1550, %v1550
    %v1615 = vmul.f32 %v1551, %v1551
    %v1616 = vmul.f32 %v1552, %v1552
    %v1617 = vmul.f32 %v1553, %v1553
    %v1618 = vmul.f32 %v1554, %v1554
    %v1619 = vadd.f32 %v1555, %v1556
    %v1620 = vadd.f32 %v1619, %v1557
    %v1621 = vadd.f32 %v1620, %v1558
    %1622 = vadd.xlane.f32.xlu0 %v1621
    %v1623 = vpop.xlane.xlu0 %1622
    %v1624 = vadd.f32 %v1559, %v1560
    %v1625 = vadd.f32 %v1624, %v1561
    %v1626 = vadd.f32 %v1625, %v1562
    %1627 = vadd.xlane.f32.xlu0 %v1626
    %v1628 = vpop.xlane.xlu0 %1627
    %v1629 = vadd.f32 %v1563, %v1564
    %v1630 = vadd.f32 %v1629, %v1565
    %v1631 = vadd.f32 %v1630, %v1566
    %1632 = vadd.xlane.f32.xlu0 %v1631
    %v1633 = vpop.xlane.xlu0 %1632
    %v1634 = vadd.f32 %v1567, %v1568
    %v1635 = vadd.f32 %v1634, %v1569
    %v1636 = vadd.f32 %v1635, %v1570
    %1637 = vadd.xlane.f32.xlu0 %v1636
    %v1638 = vpop.xlane.xlu0 %1637
    %v1639 = vadd.f32 %v1571, %v1572
    %v1640 = vadd.f32 %v1639, %v1573
    %v1641 = vadd.f32 %v1640, %v1574
    %1642 = vadd.xlane.f32.xlu0 %v1641
    %v1643 = vpop.xlane.xlu0 %1642
    %v1644 = vadd.f32 %v1575, %v1576
    %v1645 = vadd.f32 %v1644, %v1577
    %v1646 = vadd.f32 %v1645, %v1578
    %1647 = vadd.xlane.f32.xlu0 %v1646
    %v1648 = vpop.xlane.xlu0 %1647
    %v1649 = vadd.f32 %v1579, %v1580
    %v1650 = vadd.f32 %v1649, %v1581
    %v1651 = vadd.f32 %v1650, %v1582
    %1652 = vadd.xlane.f32.xlu0 %v1651
    %v1653 = vpop.xlane.xlu0 %1652
    %v1654 = vadd.f32 %v1583, %v1584
    %v1655 = vadd.f32 %v1654, %v1585
    %v1656 = vadd.f32 %v1655, %v1586
    %1657 = vadd.xlane.f32.xlu0 %v1656
    %v1658 = vpop.xlane.xlu0 %1657
    %v1659 = vadd.f32 %v1587, %v1588
    %v1660 = vadd.f32 %v1659, %v1589
    %v1661 = vadd.f32 %v1660, %v1590
    %1662 = vadd.xlane.f32.xlu0 %v1661
    %v1663 = vpop.xlane.xlu0 %1662
    %v1664 = vadd.f32 %v1591, %v1592
    %v1665 = vadd.f32 %v1664, %v1593
    %v1666 = vadd.f32 %v1665, %v1594
    %1667 = vadd.xlane.f32.xlu0 %v1666
    %v1668 = vpop.xlane.xlu0 %1667
    %v1669 = vadd.f32 %v1595, %v1596
    %v1670 = vadd.f32 %v1669, %v1597
    %v1671 = vadd.f32 %v1670, %v1598
    %1672 = vadd.xlane.f32.xlu0 %v1671
    %v1673 = vpop.xlane.xlu0 %1672
    %v1674 = vadd.f32 %v1599, %v1600
    %v1675 = vadd.f32 %v1674, %v1601
    %v1676 = vadd.f32 %v1675, %v1602
    %1677 = vadd.xlane.f32.xlu0 %v1676
    %v1678 = vpop.xlane.xlu0 %1677
    %v1679 = vadd.f32 %v1603, %v1604
    %v1680 = vadd.f32 %v1679, %v1605
    %v1681 = vadd.f32 %v1680, %v1606
    %1682 = vadd.xlane.f32.xlu0 %v1681
    %v1683 = vpop.xlane.xlu0 %1682
    %v1684 = vadd.f32 %v1607, %v1608
    %v1685 = vadd.f32 %v1684, %v1609
    %v1686 = vadd.f32 %v1685, %v1610
    %1687 = vadd.xlane.f32.xlu0 %v1686
    %v1688 = vpop.xlane.xlu0 %1687
    %v1689 = vadd.f32 %v1611, %v1612
    %v1690 = vadd.f32 %v1689, %v1613
    %v1691 = vadd.f32 %v1690, %v1614
    %1692 = vadd.xlane.f32.xlu0 %v1691
    %v1693 = vpop.xlane.xlu0 %1692
    %v1694 = vadd.f32 %v1615, %v1616
    %v1695 = vadd.f32 %v1694, %v1617
    %v1696 = vadd.f32 %v1695, %v1618
    %1697 = vadd.xlane.f32.xlu0 %v1696
    %v1698 = vpop.xlane.xlu0 %1697
    %v1699 = vrsqrt.pop %v1623
    %v1700 = vrsqrt.pop %v1628
    %v1701 = vrsqrt.pop %v1633
    %v1702 = vrsqrt.pop %v1638
    %v1703 = vrsqrt.pop %v1643
    %v1704 = vrsqrt.pop %v1648
    %v1705 = vrsqrt.pop %v1653
    %v1706 = vrsqrt.pop %v1658
    %v1707 = vrsqrt.pop %v1663
    %v1708 = vrsqrt.pop %v1668
    %v1709 = vrsqrt.pop %v1673
    %v1710 = vrsqrt.pop %v1678
    %v1711 = vrsqrt.pop %v1683
    %v1712 = vrsqrt.pop %v1688
    %v1713 = vrsqrt.pop %v1693
    %v1714 = vrsqrt.pop %v1698
    %v1715 = vmul.f32 %v1491, %v1699
    %v1716 = vmul.f32 %v1492, %v1699
    %v1717 = vmul.f32 %v1493, %v1699
    %v1718 = vmul.f32 %v1494, %v1699
    %v1719 = vmul.f32 %v1495, %v1700
    %v1720 = vmul.f32 %v1496, %v1700
    %v1721 = vmul.f32 %v1497, %v1700
    %v1722 = vmul.f32 %v1498, %v1700
    %v1723 = vmul.f32 %v1499, %v1701
    %v1724 = vmul.f32 %v1500, %v1701
    %v1725 = vmul.f32 %v1501, %v1701
    %v1726 = vmul.f32 %v1502, %v1701
    %v1727 = vmul.f32 %v1503, %v1702
    %v1728 = vmul.f32 %v1504, %v1702
    %v1729 = vmul.f32 %v1505, %v1702
    %v1730 = vmul.f32 %v1506, %v1702
    %v1731 = vmul.f32 %v1507, %v1703
    %v1732 = vmul.f32 %v1508, %v1703
    %v1733 = vmul.f32 %v1509, %v1703
    %v1734 = vmul.f32 %v1510, %v1703
    %v1735 = vmul.f32 %v1511, %v1704
    %v1736 = vmul.f32 %v1512, %v1704
    %v1737 = vmul.f32 %v1513, %v1704
    %v1738 = vmul.f32 %v1514, %v1704
    %v1739 = vmul.f32 %v1515, %v1705
    %v1740 = vmul.f32 %v1516, %v1705
    %v1741 = vmul.f32 %v1517, %v1705
    %v1742 = vmul.f32 %v1518, %v1705
    %v1743 = vmul.f32 %v1519, %v1706
    %v1744 = vmul.f32 %v1520, %v1706
    %v1745 = vmul.f32 %v1521, %v1706
    %v1746 = vmul.f32 %v1522, %v1706
    %v1747 = vmul.f32 %v1523, %v1707
    %v1748 = vmul.f32 %v1524, %v1707
    %v1749 = vmul.f32 %v1525, %v1707
    %v1750 = vmul.f32 %v1526, %v1707
    %v1751 = vmul.f32 %v1527, %v1708
    %v1752 = vmul.f32 %v1528, %v1708
    %v1753 = vmul.f32 %v1529, %v1708
    %v1754 = vmul.f32 %v1530, %v1708
    %v1755 = vmul.f32 %v1531, %v1709
    %v1756 = vmul.f32 %v1532, %v1709
    %v1757 = vmul.f32 %v1533, %v1709
    %v1758 = vmul.f32 %v1534, %v1709
    %v1759 = vmul.f32 %v1535, %v1710
    %v1760 = vmul.f32 %v1536, %v1710
    %v1761 = vmul.f32 %v1537, %v1710
    %v1762 = vmul.f32 %v1538, %v1710
    %v1763 = vmul.f32 %v1539, %v1711
    %v1764 = vmul.f32 %v1540, %v1711
    %v1765 = vmul.f32 %v1541, %v1711
    %v1766 = vmul.f32 %v1542, %v1711
    %v1767 = vmul.f32 %v1543, %v1712
    %v1768 = vmul.f32 %v1544, %v1712
    %v1769 = vmul.f32 %v1545, %v1712
    %v1770 = vmul.f32 %v1546, %v1712
    %v1771 = vmul.f32 %v1547, %v1713
    %v1772 = vmul.f32 %v1548, %v1713
    %v1773 = vmul.f32 %v1549, %v1713
    %v1774 = vmul.f32 %v1550, %v1713
    %v1775 = vmul.f32 %v1551, %v1714
    %v1776 = vmul.f32 %v1552, %v1714
    %v1777 = vmul.f32 %v1553, %v1714
    %v1778 = vmul.f32 %v1554, %v1714
    %1779 = vst [vmem:[#allocation8] sm:$0xff] %v1715
    %1780 = vst [vmem:[#allocation8 + $0x8] sm:$0xff] %v1716
    %1781 = vst [vmem:[#allocation8 + $0x10] sm:$0xff] %v1717
    %1782 = vst [vmem:[#allocation8 + $0x18] sm:$0xff] %v1718
    %1783 = vst [vmem:[#allocation8 + $0x20] sm:$0xff] %v1719
    %1784 = vst [vmem:[#allocation8 + $0x28] sm:$0xff] %v1720
    %1785 = vst [vmem:[#allocation8 + $0x30] sm:$0xff] %v1721
    %1786 = vst [vmem:[#allocation8 + $0x38] sm:$0xff] %v1722
    %1787 = vst [vmem:[#allocation8 + $0x40] sm:$0xff] %v1723
    %1788 = vst [vmem:[#allocation8 + $0x48] sm:$0xff] %v1724
    %1789 = vst [vmem:[#allocation8 + $0x50] sm:$0xff] %v1725
    %1790 = vst [vmem:[#allocation8 + $0x58] sm:$0xff] %v1726
    %1791 = vst [vmem:[#allocation8 + $0x60] sm:$0xff] %v1727
    %1792 = vst [vmem:[#allocation8 + $0x68] sm:$0xff] %v1728
    %1793 = vst [vmem:[#allocation8 + $0x70] sm:$0xff] %v1729
    %1794 = vst [vmem:[#allocation8 + $0x78] sm:$0xff] %v1730
    %1795 = vst [vmem:[#allocation8 + $0x80] sm:$0xff] %v1731
    %1796 = vst [vmem:[#allocation8 + $0x88] sm:$0xff] %v1732
    %1797 = vst [vmem:[#allocation8 + $0x90] sm:$0xff] %v1733
    %1798 = vst [vmem:[#allocation8 + $0x98] sm:$0xff] %v1734
    %1799 = vst [vmem:[#allocation8 + $0xa0] sm:$0xff] %v1735
    %1800 = vst [vmem:[#allocation8 + $0xa8] sm:$0xff] %v1736
    %1801 = vst [vmem:[#allocation8 + $0xb0] sm:$0xff] %v1737
    %1802 = vst [vmem:[#allocation8 + $0xb8] sm:$0xff] %v1738
    %1803 = vst [vmem:[#allocation8 + $0xc0] sm:$0xff] %v1739
    %1804 = vst [vmem:[#allocation8 + $0xc8] sm:$0xff] %v1740
    %1805 = vst [vmem:[#allocation8 + $0xd0] sm:$0xff] %v1741
    %1806 = vst [vmem:[#allocation8 + $0xd8] sm:$0xff] %v1742
    %1807 = vst [vmem:[#allocation8 + $0xe0] sm:$0xff] %v1743
    %1808 = vst [vmem:[#allocation8 + $0xe8] sm:$0xff] %v1744
    %1809 = vst [vmem:[#allocation8 + $0xf0] sm:$0xff] %v1745
    %1810 = vst [vmem:[#allocation8 + $0xf8] sm:$0xff] %v1746
    %1811 = vst [vmem:[#allocation8 + $0x100] sm:$0xff] %v1747
    %1812 = vst [vmem:[#allocation8 + $0x108] sm:$0xff] %v1748
    %1813 = vst [vmem:[#allocation8 + $0x110] sm:$0xff] %v1749
    %1814 = vst [vmem:[#allocation8 + $0x118] sm:$0xff] %v1750
    %1815 = vst [vmem:[#allocation8 + $0x120] sm:$0xff] %v1751
    %1816 = vst [vmem:[#allocation8 + $0x128] sm:$0xff] %v1752
    %1817 = vst [vmem:[#allocation8 + $0x130] sm:$0xff] %v1753
    %1818 = vst [vmem:[#allocation8 + $0x138] sm:$0xff] %v1754
    %1819 = vst [vmem:[#allocation8 + $0x140] sm:$0xff] %v1755
    %1820 = vst [vmem:[#allocation8 + $0x148] sm:$0xff] %v1756
    %1821 = vst [vmem:[#allocation8 + $0x150] sm:$0xff] %v1757
    %1822 = vst [vmem:[#allocation8 + $0x158] sm:$0xff] %v1758
    %1823 = vst [vmem:[#allocation8 + $0x160] sm:$0xff] %v1759
    %1824 = vst [vmem:[#allocation8 + $0x168] sm:$0xff] %v1760
    %1825 = vst [vmem:[#allocation8 + $0x170] sm:$0xff] %v1761
    %1826 = vst [vmem:[#allocation8 + $0x178] sm:$0xff] %v1762
    %1827 = vst [vmem:[#allocation8 + $0x180] sm:$0xff] %v1763
    %1828 = vst [vmem:[#allocation8 + $0x188] sm:$0xff] %v1764
    %1829 = vst [vmem:[#allocation8 + $0x190] sm:$0xff] %v1765
    %1830 = vst [vmem:[#allocation8 + $0x198] sm:$0xff] %v1766
    %1831 = vst [vmem:[#allocation8 + $0x1a0] sm:$0xff] %v1767
    %1832 = vst [vmem:[#allocation8 + $0x1a8] sm:$0xff] %v1768
    %1833 = vst [vmem:[#allocation8 + $0x1b0] sm:$0xff] %v1769
    %1834 = vst [vmem:[#allocation8 + $0x1b8] sm:$0xff] %v1770
    %1835 = vst [vmem:[#allocation8 + $0x1c0] sm:$0xff] %v1771
    %1836 = vst [vmem:[#allocation8 + $0x1c8] sm:$0xff] %v1772
    %1837 = vst [vmem:[#allocation8 + $0x1d0] sm:$0xff] %v1773
    %1838 = vst [vmem:[#allocation8 + $0x1d8] sm:$0xff] %v1774
    %1839 = vst [vmem:[#allocation8 + $0x1e0] sm:$0xff] %v1775
    %1840 = vst [vmem:[#allocation8 + $0x1e8] sm:$0xff] %v1776
    %1841 = vst [vmem:[#allocation8 + $0x1f0] sm:$0xff] %v1777
    %1842 = vst [vmem:[#allocation8 + $0x1f8] sm:$0xff] %v1778
    %s1843 = sld [smem:[#allocation2]]
    %v1844 = vstv %s1843
    %v1845 = vmul.f32 %v1844, 1.442695
    %v1846 = vpow.pop %v1845
    %s1847 = vtos %v1846
    %v1848 = vstv %s1847
    %v1849 = vmul.f32 %v1848, %v1715
    %v1850 = vmul.f32 %v1848, %v1716
    %v1851 = vmul.f32 %v1848, %v1717
    %v1852 = vmul.f32 %v1848, %v1718
    %v1853 = vmul.f32 %v1848, %v1719
    %v1854 = vmul.f32 %v1848, %v1720
    %v1855 = vmul.f32 %v1848, %v1721
    %v1856 = vmul.f32 %v1848, %v1722
    %v1857 = vmul.f32 %v1848, %v1723
    %v1858 = vmul.f32 %v1848, %v1724
    %v1859 = vmul.f32 %v1848, %v1725
    %v1860 = vmul.f32 %v1848, %v1726
    %v1861 = vmul.f32 %v1848, %v1727
    %v1862 = vmul.f32 %v1848, %v1728
    %v1863 = vmul.f32 %v1848, %v1729
    %v1864 = vmul.f32 %v1848, %v1730
    %v1865 = vmul.f32 %v1848, %v1731
    %v1866 = vmul.f32 %v1848, %v1732
    %v1867 = vmul.f32 %v1848, %v1733
    %v1868 = vmul.f32 %v1848, %v1734
    %v1869 = vmul.f32 %v1848, %v1735
    %v1870 = vmul.f32 %v1848, %v1736
    %v1871 = vmul.f32 %v1848, %v1737
    %v1872 = vmul.f32 %v1848, %v1738
    %v1873 = vmul.f32 %v1848, %v1739
    %v1874 = vmul.f32 %v1848, %v1740
    %v1875 = vmul.f32 %v1848, %v1741
    %v1876 = vmul.f32 %v1848, %v1742
    %v1877 = vmul.f32 %v1848, %v1743
    %v1878 = vmul.f32 %v1848, %v1744
    %v1879 = vmul.f32 %v1848, %v1745
    %v1880 = vmul.f32 %v1848, %v1746
    %v1881 = vmul.f32 %v1848, %v1747
    %v1882 = vmul.f32 %v1848, %v1748
    %v1883 = vmul.f32 %v1848, %v1749
    %v1884 = vmul.f32 %v1848, %v1750
    %v1885 = vmul.f32 %v1848, %v1751
    %v1886 = vmul.f32 %v1848, %v1752
    %v1887 = vmul.f32 %v1848, %v1753
    %v1888 = vmul.f32 %v1848, %v1754
    %v1889 = vmul.f32 %v1848, %v1755
    %v1890 = vmul.f32 %v1848, %v1756
    %v1891 = vmul.f32 %v1848, %v1757
    %v1892 = vmul.f32 %v1848, %v1758
    %v1893 = vmul.f32 %v1848, %v1759
    %v1894 = vmul.f32 %v1848, %v1760
    %v1895 = vmul.f32 %v1848, %v1761
    %v1896 = vmul.f32 %v1848, %v1762
    %v1897 = vmul.f32 %v1848, %v1763
    %v1898 = vmul.f32 %v1848, %v1764
    %v1899 = vmul.f32 %v1848, %v1765
    %v1900 = vmul.f32 %v1848, %v1766
    %v1901 = vmul.f32 %v1848, %v1767
    %v1902 = vmul.f32 %v1848, %v1768
    %v1903 = vmul.f32 %v1848, %v1769
    %v1904 = vmul.f32 %v1848, %v1770
    %v1905 = vmul.f32 %v1848, %v1771
    %v1906 = vmul.f32 %v1848, %v1772
    %v1907 = vmul.f32 %v1848, %v1773
    %v1908 = vmul.f32 %v1848, %v1774
    %v1909 = vmul.f32 %v1848, %v1775
    %v1910 = vmul.f32 %v1848, %v1776
    %v1911 = vmul.f32 %v1848, %v1777
    %v1912 = vmul.f32 %v1848, %v1778
    %1913 = vst [vmem:[#allocation9] sm:$0xff] %v1849
    %1914 = vst [vmem:[#allocation9 + $0x8] sm:$0xff] %v1850
    %1915 = vst [vmem:[#allocation9 + $0x10] sm:$0xff] %v1851
    %1916 = vst [vmem:[#allocation9 + $0x18] sm:$0xff] %v1852
    %1917 = vst [vmem:[#allocation9 + $0x20] sm:$0xff] %v1853
    %1918 = vst [vmem:[#allocation9 + $0x28] sm:$0xff] %v1854
    %1919 = vst [vmem:[#allocation9 + $0x30] sm:$0xff] %v1855
    %1920 = vst [vmem:[#allocation9 + $0x38] sm:$0xff] %v1856
    %1921 = vst [vmem:[#allocation9 + $0x40] sm:$0xff] %v1857
    %1922 = vst [vmem:[#allocation9 + $0x48] sm:$0xff] %v1858
    %1923 = vst [vmem:[#allocation9 + $0x50] sm:$0xff] %v1859
    %1924 = vst [vmem:[#allocation9 + $0x58] sm:$0xff] %v1860
    %1925 = vst [vmem:[#allocation9 + $0x60] sm:$0xff] %v1861
    %1926 = vst [vmem:[#allocation9 + $0x68] sm:$0xff] %v1862
    %1927 = vst [vmem:[#allocation9 + $0x70] sm:$0xff] %v1863
    %1928 = vst [vmem:[#allocation9 + $0x78] sm:$0xff] %v1864
    %1929 = vst [vmem:[#allocation9 + $0x80] sm:$0xff] %v1865
    %1930 = vst [vmem:[#allocation9 + $0x88] sm:$0xff] %v1866
    %1931 = vst [vmem:[#allocation9 + $0x90] sm:$0xff] %v1867
    %1932 = vst [vmem:[#allocation9 + $0x98] sm:$0xff] %v1868
    %1933 = vst [vmem:[#allocation9 + $0xa0] sm:$0xff] %v1869
    %1934 = vst [vmem:[#allocation9 + $0xa8] sm:$0xff] %v1870
    %1935 = vst [vmem:[#allocation9 + $0xb0] sm:$0xff] %v1871
    %1936 = vst [vmem:[#allocation9 + $0xb8] sm:$0xff] %v1872
    %1937 = vst [vmem:[#allocation9 + $0xc0] sm:$0xff] %v1873
    %1938 = vst [vmem:[#allocation9 + $0xc8] sm:$0xff] %v1874
    %1939 = vst [vmem:[#allocation9 + $0xd0] sm:$0xff] %v1875
    %1940 = vst [vmem:[#allocation9 + $0xd8] sm:$0xff] %v1876
    %1941 = vst [vmem:[#allocation9 + $0xe0] sm:$0xff] %v1877
    %1942 = vst [vmem:[#allocation9 + $0xe8] sm:$0xff] %v1878
    %1943 = vst [vmem:[#allocation9 + $0xf0] sm:$0xff] %v1879
    %1944 = vst [vmem:[#allocation9 + $0xf8] sm:$0xff] %v1880
    %1945 = vst [vmem:[#allocation9 + $0x100] sm:$0xff] %v1881
    %1946 = vst [vmem:[#allocation9 + $0x108] sm:$0xff] %v1882
    %1947 = vst [vmem:[#allocation9 + $0x110] sm:$0xff] %v1883
    %1948 = vst [vmem:[#allocation9 + $0x118] sm:$0xff] %v1884
    %1949 = vst [vmem:[#allocation9 + $0x120] sm:$0xff] %v1885
    %1950 = vst [vmem:[#allocation9 + $0x128] sm:$0xff] %v1886
    %1951 = vst [vmem:[#allocation9 + $0x130] sm:$0xff] %v1887
    %1952 = vst [vmem:[#allocation9 + $0x138] sm:$0xff] %v1888
    %1953 = vst [vmem:[#allocation9 + $0x140] sm:$0xff] %v1889
    %1954 = vst [vmem:[#allocation9 + $0x148] sm:$0xff] %v1890
    %1955 = vst [vmem:[#allocation9 + $0x150] sm:$0xff] %v1891
    %1956 = vst [vmem:[#allocation9 + $0x158] sm:$0xff] %v1892
    %1957 = vst [vmem:[#allocation9 + $0x160] sm:$0xff] %v1893
    %1958 = vst [vmem:[#allocation9 + $0x168] sm:$0xff] %v1894
    %1959 = vst [vmem:[#allocation9 + $0x170] sm:$0xff] %v1895
    %1960 = vst [vmem:[#allocation9 + $0x178] sm:$0xff] %v1896
    %1961 = vst [vmem:[#allocation9 + $0x180] sm:$0xff] %v1897
    %1962 = vst [vmem:[#allocation9 + $0x188] sm:$0xff] %v1898
    %1963 = vst [vmem:[#allocation9 + $0x190] sm:$0xff] %v1899
    %1964 = vst [vmem:[#allocation9 + $0x198] sm:$0xff] %v1900
    %1965 = vst [vmem:[#allocation9 + $0x1a0] sm:$0xff] %v1901
    %1966 = vst [vmem:[#allocation9 + $0x1a8] sm:$0xff] %v1902
    %1967 = vst [vmem:[#allocation9 + $0x1b0] sm:$0xff] %v1903
    %1968 = vst [vmem:[#allocation9 + $0x1b8] sm:$0xff] %v1904
    %1969 = vst [vmem:[#allocation9 + $0x1c0] sm:$0xff] %v1905
    %1970 = vst [vmem:[#allocation9 + $0x1c8] sm:$0xff] %v1906
    %1971 = vst [vmem:[#allocation9 + $0x1d0] sm:$0xff] %v1907
    %1972 = vst [vmem:[#allocation9 + $0x1d8] sm:$0xff] %v1908
    %1973 = vst [vmem:[#allocation9 + $0x1e0] sm:$0xff] %v1909
    %1974 = vst [vmem:[#allocation9 + $0x1e8] sm:$0xff] %v1910
    %1975 = vst [vmem:[#allocation9 + $0x1f0] sm:$0xff] %v1911
    %1976 = vst [vmem:[#allocation9 + $0x1f8] sm:$0xff] %v1912
    // Predicated region
    $region22: #{tpu_custom_call.1} parent=1 // pred_check
      _
    $region23: #{tpu_custom_call.1} parent=1 // pred_check_branch
      %1978 = sbr.rel (0) target = $region25
    $region24: #{tpu_custom_call.1} parent=1 // pred_region
      %s1980 = ssub.s32 8192, 8192
      %1981 = vsyncadd [#allocation5], %s1980
      %s1982 = sshll.u32 [#allocation8], 4
      %s1983 = int_to_ptr.vmem [resolvable:$true] %s1982
      %1988 = dma.vmem_to_hbm [thread:$0]  %s1983, 8192, %s3, [#allocation5], 512, 512, 32
    $region25: #{tpu_custom_call.1} parent=1 // pred_fallthru
      _
    // Predicated region
    $region26: #{tpu_custom_call.1} parent=1 // pred_check
      _
    $region27: #{tpu_custom_call.1} parent=1 // pred_check_branch
      %1990 = sbr.rel (0) target = $region29
    $region28: #{tpu_custom_call.1} parent=1 // pred_region
      %s1992 = ssub.s32 8192, 8192
      %1993 = vsyncadd [#allocation10], %s1992
      %s1994 = sshll.u32 [#allocation9], 4
      %s1995 = int_to_ptr.vmem [resolvable:$true] %s1994
      %2000 = dma.vmem_to_hbm [thread:$0]  %s1995, 8192, %s4, [#allocation10], 512, 512, 32
    $region29: #{tpu_custom_call.1} parent=1 // pred_fallthru
      _
    // Predicated region
    $region30: #{tpu_custom_call.1} parent=1 // pred_check
      _
    $region31: #{tpu_custom_call.1} parent=1 // pred_check_branch
      %2002 = sbr.rel (0) target = $region33
    $region32: #{tpu_custom_call.1} parent=1 // pred_region
      %2003 = dma.done [#allocation5], 8192
    $region33: #{tpu_custom_call.1} parent=1 // pred_fallthru
      _
    // Predicated region
    $region34: #{tpu_custom_call.1} parent=1 // pred_check
      _
    $region35: #{tpu_custom_call.1} parent=1 // pred_check_branch
      %2005 = sbr.rel (0) target = $region37
    $region36: #{tpu_custom_call.1} parent=1 // pred_region
      %2006 = dma.done [#allocation10], 8192
    $region37: #{tpu_custom_call.1} parent=1 // pred_fallthru
      _
    %2007 = vsyncpa [#allocation4], 1
    %2008 = vsyncpa [#allocation7], 1
    %2009 = vsyncpa [#allocation5], 1
    %2010 = vsyncpa [#allocation10], 1

</llo_original>
